<compile_context>
chip_gen: v7x
topology: tpu7x:2x2x1
jax: 0.10.0
libtpu: 0.0.40
codegen_flags: <defaults>
</compile_context>

<pallas_src>
import jax
import jax.numpy as jnp
from jax.experimental import pallas as pl
from jax.experimental.pallas import tpu as pltpu

LANE = 128


def _round_up(x, m):
    return (x + m - 1) // m * m


def actor_kernel(x_ref, w1_ref, b1_ref, w2_ref, b2_ref, w3_ref, b3_ref, out_ref):
    """One batch tile: 3 MXU matmuls (bf16 operands, f32 acc) + VPU relu + EUP tanh."""
    x = x_ref[...]                                                    # bf16 [TM, S]

    h = jnp.dot(x, w1_ref[...], preferred_element_type=jnp.float32) + b1_ref[...]
    h = jnp.maximum(h, 0.0)                                           # f32 [TM, 512]

    h = jnp.dot(h.astype(jnp.bfloat16), w2_ref[...],
                preferred_element_type=jnp.float32) + b2_ref[...]
    h = jnp.maximum(h, 0.0)                                           # f32 [TM, 384]

    a = jnp.dot(h.astype(jnp.bfloat16), w3_ref[...],
                preferred_element_type=jnp.float32) + b3_ref[...]     # f32 [TM, 128]
    out_ref[...] = jnp.tanh(a)                                        # lane-dense store


def actor_forward(state, padded_params, action_dim, *, tm=128):
    """state: [n, state_dim] f32.  Returns [n, action_dim] f32."""
    w1, b1, w2, b2, w3, b3 = padded_params
    n, state_dim = state.shape
    h1p, h2p, outp = w1.shape[1], w2.shape[1], w3.shape[1]

    # Pad batch up to a multiple of the row tile (zeros are harmless, sliced off).
    n_pad = _round_up(n, tm)
    x = jnp.zeros((n_pad, state_dim), jnp.bfloat16).at[:n].set(
        state.astype(jnp.bfloat16))

    grid = (n_pad // tm,)

    in_specs = [
        pl.BlockSpec((tm, state_dim), lambda i: (i, 0)),      # state tile (streamed)
        pl.BlockSpec((state_dim, h1p), lambda i: (0, 0)),     # weights: VMEM-resident
        pl.BlockSpec((1, h1p), lambda i: (0, 0)),
        pl.BlockSpec((h1p, h2p), lambda i: (0, 0)),
        pl.BlockSpec((1, h2p), lambda i: (0, 0)),
        pl.BlockSpec((h2p, outp), lambda i: (0, 0)),
        pl.BlockSpec((1, outp), lambda i: (0, 0)),
    ]
    out_specs = pl.BlockSpec((tm, outp), lambda i: (i, 0))

    flops = 2 * n_pad * (state_dim * h1p + h1p * h2p + h2p * outp)
    bytes_accessed = (
        x.size * x.dtype.itemsize
        + sum(a.size * a.dtype.itemsize for a in (w1, b1, w2, b2, w3, b3))
        + n_pad * outp * 4
    )
    cost = pl.CostEstimate(flops=flops,
                           transcendentals=n_pad * outp,
                           bytes_accessed=bytes_accessed)

    out = pl.pallas_call(
        actor_kernel,
        out_shape=jax.ShapeDtypeStruct((n_pad, outp), jnp.float32),
        grid=grid,
        in_specs=in_specs,
        out_specs=out_specs,
        compiler_params=pltpu.CompilerParams(
            dimension_semantics=("parallel",)),
        cost_estimate=cost,
    )(x, w1, b1, w2, b2, w3, b3)

    return out[:n, :action_dim]


def init_actor_params(key, state_dim, action_dim, h1=400, h2=300):
    """PyTorch nn.Linear default init: U(-1/sqrt(fan_in), 1/sqrt(fan_in)).
    Weights stored as [in, out] (transposed vs torch's [out, in])."""
    def linear(k, fan_in, fan_out):
        kw, kb = jax.random.split(k)
        bound = 1.0 / jnp.sqrt(jnp.float32(fan_in))
        w = jax.random.uniform(kw, (fan_in, fan_out), jnp.float32, -bound, bound)
        b = jax.random.uniform(kb, (1, fan_out), jnp.float32, -bound, bound)
        return w, b

    k1, k2, k3 = jax.random.split(key, 3)
    w1, b1 = linear(k1, state_dim, h1)
    w2, b2 = linear(k2, h1, h2)
    w3, b3 = linear(k3, h2, action_dim)
    return (w1, b1, w2, b2, w3, b3)


def prepare_actor_params(params):
    """Zero-pad feature dims to multiples of 128 lanes and cast weights to bf16.
    Padded columns get zero weight AND zero bias so they stay exactly 0 through
    ReLU and contribute nothing to the next layer. Biases stay f32."""
    w1, b1, w2, b2, w3, b3 = params
    s, h1 = w1.shape
    h2 = w2.shape[1]
    a = w3.shape[1]
    h1p, h2p, ap = _round_up(h1, LANE), _round_up(h2, LANE), _round_up(a, LANE)

    def pad2(x, r, c):
        return jnp.zeros((r, c), x.dtype).at[: x.shape[0], : x.shape[1]].set(x)

    w1p = pad2(w1, s, h1p).astype(jnp.bfloat16)
    b1p = pad2(b1, 1, h1p)
    w2p = pad2(w2, h1p, h2p).astype(jnp.bfloat16)   # padded rows are zero
    b2p = pad2(b2, 1, h2p)
    w3p = pad2(w3, h2p, ap).astype(jnp.bfloat16)
    b3p = pad2(b3, 1, ap)
    return (w1p, b1p, w2p, b2p, w3p, b3p)


def actor_reference_f32(state, params):
    """Pure-f32 JAX reference (loose check)."""
    w1, b1, w2, b2, w3, b3 = params
    h = jnp.maximum(state @ w1 + b1, 0.0)
    h = jnp.maximum(h @ w2 + b2, 0.0)
    return jnp.tanh(h @ w3 + b3)


def actor_reference_matched(state, padded_params, action_dim):
    """Precision-matched reference (same bf16 operands / f32 accumulation)."""
    w1, b1, w2, b2, w3, b3 = padded_params
    x = state.astype(jnp.bfloat16)
    h = jnp.maximum(jnp.dot(x, w1, preferred_element_type=jnp.float32) + b1, 0.0)
    h = jnp.maximum(jnp.dot(h.astype(jnp.bfloat16), w2,
                            preferred_element_type=jnp.float32) + b2, 0.0)
    a = jnp.dot(h.astype(jnp.bfloat16), w3,
                preferred_element_type=jnp.float32) + b3
    return jnp.tanh(a)[:, :action_dim]


if __name__ == "__main__":
    key = jax.random.PRNGKey(0)
    k_params, k_state = jax.random.split(key)

    # Small, module-consistent shapes: batch=2, state_dim=8, action_dim=4,
    # hidden layers at the module defaults h1=400, h2=300.
    batch, state_dim, action_dim = 2, 8, 4
    params = init_actor_params(k_params, state_dim, action_dim, h1=400, h2=300)
    padded_params = prepare_actor_params(params)
    state = jax.random.normal(k_state, (batch, state_dim), jnp.float32)

    action = actor_forward(state, padded_params, action_dim)
    action = jax.block_until_ready(action)
    assert action.shape == (batch, action_dim)

    # Tight check vs. a precision-matched (bf16-operand) reference.
    ref_matched = actor_reference_matched(state, padded_params, action_dim)
    assert jnp.allclose(action, ref_matched, atol=1e-4, rtol=1e-4), \
        "mismatch vs precision-matched reference"

    # Loose sanity check vs. the pure-f32 reference (bf16 cast error only).
    ref_f32 = actor_reference_f32(state, params)
    assert jnp.allclose(action, ref_f32, atol=3e-2, rtol=3e-2), \
        "mismatch vs f32 reference"

    print("KERNEL_OK")
</pallas_src>

<mosaic_0001>
module attributes {stable_mosaic.version = 11 : i64} {
  func.func @actor_kernel(%arg0: i32, %arg1: memref<128x8xbf16, #tpu.memory_space<vmem>>, %arg2: memref<8x512xbf16, #tpu.memory_space<vmem>>, %arg3: memref<1x512xf32, #tpu.memory_space<vmem>>, %arg4: memref<512x384xbf16, #tpu.memory_space<vmem>>, %arg5: memref<1x384xf32, #tpu.memory_space<vmem>>, %arg6: memref<384x128xbf16, #tpu.memory_space<vmem>>, %arg7: memref<1x128xf32, #tpu.memory_space<vmem>>, %arg8: memref<128x128xf32, #tpu.memory_space<vmem>>) attributes {dimension_semantics = [#tpu.dimension_semantics<parallel>], iteration_bounds = array<i64: 1>, scalar_prefetch = 0 : i64, scratch_operands = 0 : i64, tpu.core_type = #tpu.core_type<tc>, window_params = [{transform_indices = @transform_0, window_bounds = array<i64: 128, 8>}, {pipeline_mode = #tpu.pipeline_mode<synchronous>, transform_indices = @transform_1, window_bounds = array<i64: 8, 512>}, {pipeline_mode = #tpu.pipeline_mode<synchronous>, transform_indices = @transform_2, window_bounds = array<i64: 1, 512>}, {pipeline_mode = #tpu.pipeline_mode<synchronous>, transform_indices = @transform_3, window_bounds = array<i64: 512, 384>}, {pipeline_mode = #tpu.pipeline_mode<synchronous>, transform_indices = @transform_4, window_bounds = array<i64: 1, 384>}, {pipeline_mode = #tpu.pipeline_mode<synchronous>, transform_indices = @transform_5, window_bounds = array<i64: 384, 128>}, {pipeline_mode = #tpu.pipeline_mode<synchronous>, transform_indices = @transform_6, window_bounds = array<i64: 1, 128>}, {transform_indices = @transform_7, window_bounds = array<i64: 128, 128>}]} {
    %c0 = arith.constant 0 : index
    %c0_0 = arith.constant 0 : index
    %0 = vector.load %arg1[%c0, %c0_0] : memref<128x8xbf16, #tpu.memory_space<vmem>>, vector<128x8xbf16>
    %c0_1 = arith.constant 0 : index
    %c0_2 = arith.constant 0 : index
    %1 = vector.load %arg2[%c0_1, %c0_2] : memref<8x512xbf16, #tpu.memory_space<vmem>>, vector<8x512xbf16>
    %cst = arith.constant dense<0.000000e+00> : vector<128x512xf32>
    %2 = tpu.matmul %0, %1, %cst {dimension_numbers = #tpu.dot_dimension_numbers<[1], [0], [0], [1], [0, 0, 1, 1], [], []>} : vector<128x8xbf16>, vector<8x512xbf16>, vector<128x512xf32> -> vector<128x512xf32>
    %c0_3 = arith.constant 0 : index
    %c0_4 = arith.constant 0 : index
    %3 = vector.load %arg3[%c0_3, %c0_4] : memref<1x512xf32, #tpu.memory_space<vmem>>, vector<1x512xf32>
    %4 = vector.broadcast %3 : vector<1x512xf32> to vector<128x512xf32>
    %5 = arith.addf %2, %4 : vector<128x512xf32>
    %cst_5 = arith.constant 0.000000e+00 : f32
    %6 = vector.broadcast %cst_5 : f32 to vector<128x512xf32>
    %7 = arith.maximumf %5, %6 : vector<128x512xf32>
    %8 = arith.truncf %7 : vector<128x512xf32> to vector<128x512xbf16>
    %c0_6 = arith.constant 0 : index
    %c0_7 = arith.constant 0 : index
    %9 = vector.load %arg4[%c0_6, %c0_7] : memref<512x384xbf16, #tpu.memory_space<vmem>>, vector<512x384xbf16>
    %cst_8 = arith.constant dense<0.000000e+00> : vector<128x384xf32>
    %10 = tpu.matmul %8, %9, %cst_8 {dimension_numbers = #tpu.dot_dimension_numbers<[1], [0], [0], [1], [0, 0, 1, 1], [], []>} : vector<128x512xbf16>, vector<512x384xbf16>, vector<128x384xf32> -> vector<128x384xf32>
    %c0_9 = arith.constant 0 : index
    %c0_10 = arith.constant 0 : index
    %11 = vector.load %arg5[%c0_9, %c0_10] : memref<1x384xf32, #tpu.memory_space<vmem>>, vector<1x384xf32>
    %12 = vector.broadcast %11 : vector<1x384xf32> to vector<128x384xf32>
    %13 = arith.addf %10, %12 : vector<128x384xf32>
    %cst_11 = arith.constant 0.000000e+00 : f32
    %14 = vector.broadcast %cst_11 : f32 to vector<128x384xf32>
    %15 = arith.maximumf %13, %14 : vector<128x384xf32>
    %16 = arith.truncf %15 : vector<128x384xf32> to vector<128x384xbf16>
    %c0_12 = arith.constant 0 : index
    %c0_13 = arith.constant 0 : index
    %17 = vector.load %arg6[%c0_12, %c0_13] : memref<384x128xbf16, #tpu.memory_space<vmem>>, vector<384x128xbf16>
    %cst_14 = arith.constant dense<0.000000e+00> : vector<128x128xf32>
    %18 = tpu.matmul %16, %17, %cst_14 {dimension_numbers = #tpu.dot_dimension_numbers<[1], [0], [0], [1], [0, 0, 1, 1], [], []>} : vector<128x384xbf16>, vector<384x128xbf16>, vector<128x128xf32> -> vector<128x128xf32>
    %c0_15 = arith.constant 0 : index
    %c0_16 = arith.constant 0 : index
    %19 = vector.load %arg7[%c0_15, %c0_16] : memref<1x128xf32, #tpu.memory_space<vmem>>, vector<1x128xf32>
    %20 = vector.broadcast %19 : vector<1x128xf32> to vector<128x128xf32>
    %21 = arith.addf %18, %20 : vector<128x128xf32>
    %22 = math.tanh %21 : vector<128x128xf32>
    %c0_17 = arith.constant 0 : index
    %c0_18 = arith.constant 0 : index
    %23 = vector.load %arg8[%c0_17, %c0_18] : memref<128x128xf32, #tpu.memory_space<vmem>>, vector<128x128xf32>
    tpu.vector_store %arg8[%c0_17, %c0_18], %22 {strides = array<i32>} : memref<128x128xf32, #tpu.memory_space<vmem>>, vector<128x128xf32>,
    return
  }
  func.func @transform_0(%arg0: i32) -> (i32, i32) {
    %c0_i32 = arith.constant 0 : i32
    %c0_i32_0 = arith.constant 0 : i32
    return %arg0, %c0_i32 : i32, i32
  }
  func.func @transform_1(%arg0: i32) -> (i32, i32) {
    %c0_i32 = arith.constant 0 : i32
    %c0_i32_0 = arith.constant 0 : i32
    %c0_i32_1 = arith.constant 0 : i32
    return %c0_i32, %c0_i32_0 : i32, i32
  }
  func.func @transform_2(%arg0: i32) -> (i32, i32) {
    %c0_i32 = arith.constant 0 : i32
    %c0_i32_0 = arith.constant 0 : i32
    %c0_i32_1 = arith.constant 0 : i32
    return %c0_i32, %c0_i32_0 : i32, i32
  }
  func.func @transform_3(%arg0: i32) -> (i32, i32) {
    %c0_i32 = arith.constant 0 : i32
    %c0_i32_0 = arith.constant 0 : i32
    %c0_i32_1 = arith.constant 0 : i32
    return %c0_i32, %c0_i32_0 : i32, i32
  }
  func.func @transform_4(%arg0: i32) -> (i32, i32) {
    %c0_i32 = arith.constant 0 : i32
    %c0_i32_0 = arith.constant 0 : i32
    %c0_i32_1 = arith.constant 0 : i32
    return %c0_i32, %c0_i32_0 : i32, i32
  }
  func.func @transform_5(%arg0: i32) -> (i32, i32) {
    %c0_i32 = arith.constant 0 : i32
    %c0_i32_0 = arith.constant 0 : i32
    %c0_i32_1 = arith.constant 0 : i32
    return %c0_i32, %c0_i32_0 : i32, i32
  }
  func.func @transform_6(%arg0: i32) -> (i32, i32) {
    %c0_i32 = arith.constant 0 : i32
    %c0_i32_0 = arith.constant 0 : i32
    %c0_i32_1 = arith.constant 0 : i32
    return %c0_i32, %c0_i32_0 : i32, i32
  }
  func.func @transform_7(%arg0: i32) -> (i32, i32) {
    %c0_i32 = arith.constant 0 : i32
    %c0_i32_0 = arith.constant 0 : i32
    return %arg0, %c0_i32 : i32, i32
  }
}

</mosaic_0001>

<llo_original>
// kernel: tpu_custom_call.1
$region0: #{tpu_custom_call.1}
  #allocation0 [shape = 'u32[]', space=smem, size = 0x4, offset = 0x4, fixed_abs, tag = 'smem constant byte address 0x4 - core index']
  #allocation1 [shape = 'u32[144,128]{1,0:T(1,128)}', space=vmem, size = 0x12000, scoped, tag = 'internal scratch']
  %s0 = inlined_call_operand.vmem [shape: bf16[128,8], index: 0, kind: input, shape index: {}]
  %s1 = inlined_call_operand.vmem [shape: bf16[8,512], index: 1, kind: input, shape index: {}]
  %s2 = inlined_call_operand.vmem [shape: f32[1,512], index: 2, kind: input, shape index: {}]
  %s3 = inlined_call_operand.hbm [shape: bf16[512,384], index: 3, kind: input, shape index: {}]
  %s4 = inlined_call_operand.vmem [shape: f32[1,384], index: 4, kind: input, shape index: {}]
  %s5 = inlined_call_operand.hbm [shape: bf16[384,128], index: 5, kind: input, shape index: {}]
  %s6 = inlined_call_operand.vmem [shape: f32[1,128], index: 6, kind: input, shape index: {}]
  %s7 = inlined_call_operand.hbm [shape: f32[128,128], index: 7, kind: output, shape index: {}]
  %s8 = sld [smem:[#allocation0]]
  $region46: #{tpu_custom_call.1} parent=0
    _
  %s10 = ssub.s32 1, %s8
  %s11 = scalar_select 0, %s10, %s8
  $region1: #{tpu_custom_call.1} parent=0
    #allocation2 [shape = 'u8[393216]{0}', space=vmem, size = 0x60000, scoped, tag = 'input window, operand 3, single buffered']
    #allocation3 [shape = 's32[1]{0}', space=sflag, size = 0x4, scoped, tag = 'scoped memory for tpu_custom_call.1']
    #allocation4 [shape = 's32[1]{0}', space=sflag, size = 0x4, scoped, tag = 'scoped memory for tpu_custom_call.1']
    #allocation5 [shape = 'u8[98304]{0}', space=vmem, size = 0x18000, scoped, tag = 'input window, operand 5, single buffered']
    #allocation6 [shape = 's32[1]{0}', space=sflag, size = 0x4, scoped, tag = 'scoped memory for tpu_custom_call.1']
    #allocation7 [shape = 'u8[65536]{0}', space=vmem, size = 0x10000, scoped, tag = 'output window, operand 0, single buffered']
    %12 = vsyncpa [#allocation3], 0
    %13 = vsyncpa [#allocation6], 0
    %14 = vsyncpa [#allocation4], 0
    // Predicated region
    $region2: #{tpu_custom_call.1} parent=1 // pred_check
      _
    $region3: #{tpu_custom_call.1} parent=1 // pred_check_branch
      %16 = sbr.rel (0) target = $region5
    $region4: #{tpu_custom_call.1} parent=1 // pred_region
      _
    $region5: #{tpu_custom_call.1} parent=1 // pred_fallthru
      _
    // Predicated region
    $region6: #{tpu_custom_call.1} parent=1 // pred_check
      _
    $region7: #{tpu_custom_call.1} parent=1 // pred_check_branch
      %18 = sbr.rel (0) target = $region9
    $region8: #{tpu_custom_call.1} parent=1 // pred_region
      _
    $region9: #{tpu_custom_call.1} parent=1 // pred_fallthru
      _
    // Predicated region
    $region10: #{tpu_custom_call.1} parent=1 // pred_check
      _
    $region11: #{tpu_custom_call.1} parent=1 // pred_check_branch
      %20 = sbr.rel (0) target = $region13
    $region12: #{tpu_custom_call.1} parent=1 // pred_region
      _
    $region13: #{tpu_custom_call.1} parent=1 // pred_fallthru
      _
    // Predicated region
    $region14: #{tpu_custom_call.1} parent=1 // pred_check
      _
    $region15: #{tpu_custom_call.1} parent=1 // pred_check_branch
      %22 = sbr.rel (0) target = $region17
    $region16: #{tpu_custom_call.1} parent=1 // pred_region
      %s24 = ssub.s32 12288, 12288
      %25 = vsyncadd [#allocation3], %s24
      %s26 = sshll.u32 [#allocation2], 4
      %s27 = int_to_ptr.vmem [resolvable:$true] %s26
      %32 = dma.hbm_to_vmem [thread:$0]  %s3, 12288, %s27, [#allocation3], 192, 192, 12
    $region17: #{tpu_custom_call.1} parent=1 // pred_fallthru
      _
    // Predicated region
    $region18: #{tpu_custom_call.1} parent=1 // pred_check
      _
    $region19: #{tpu_custom_call.1} parent=1 // pred_check_branch
      %34 = sbr.rel (0) target = $region21
    $region20: #{tpu_custom_call.1} parent=1 // pred_region
      _
    $region21: #{tpu_custom_call.1} parent=1 // pred_fallthru
      _
    // Predicated region
    $region22: #{tpu_custom_call.1} parent=1 // pred_check
      _
    $region23: #{tpu_custom_call.1} parent=1 // pred_check_branch
      %36 = sbr.rel (0) target = $region25
    $region24: #{tpu_custom_call.1} parent=1 // pred_region
      %s38 = ssub.s32 3072, 3072
      %39 = vsyncadd [#allocation6], %s38
      %s40 = sshll.u32 [#allocation5], 4
      %s41 = int_to_ptr.vmem [resolvable:$true] %s40
      %46 = dma.hbm_to_vmem [thread:$0]  %s5, 3072, %s41, [#allocation6], 64, 64, 4
    $region25: #{tpu_custom_call.1} parent=1 // pred_fallthru
      _
    // Predicated region
    $region26: #{tpu_custom_call.1} parent=1 // pred_check
      _
    $region27: #{tpu_custom_call.1} parent=1 // pred_check_branch
      %48 = sbr.rel (0) target = $region29
    $region28: #{tpu_custom_call.1} parent=1 // pred_region
      _
    $region29: #{tpu_custom_call.1} parent=1 // pred_fallthru
      _
    // Predicated region
    $region30: #{tpu_custom_call.1} parent=1 // pred_check
      _
    $region31: #{tpu_custom_call.1} parent=1 // pred_check_branch
      %50 = sbr.rel (0) target = $region33
    $region32: #{tpu_custom_call.1} parent=1 // pred_region
      %51 = dma.done [#allocation3], 12288
    $region33: #{tpu_custom_call.1} parent=1 // pred_fallthru
      _
    // Predicated region
    $region34: #{tpu_custom_call.1} parent=1 // pred_check
      _
    $region35: #{tpu_custom_call.1} parent=1 // pred_check_branch
      %53 = sbr.rel (0) target = $region37
    $region36: #{tpu_custom_call.1} parent=1 // pred_region
      %54 = dma.done [#allocation6], 3072
    $region37: #{tpu_custom_call.1} parent=1 // pred_fallthru
      _
    %v56 = vld [vmem:[%s0] sm:$0xf]
    %v57 = vld [vmem:[%s0 + $0x4] sm:$0xf]
    %v58 = vld [vmem:[%s0 + $0x8] sm:$0xf]
    %v59 = vld [vmem:[%s0 + $0xc] sm:$0xf]
    %v60 = vld [vmem:[%s0 + $0x10] sm:$0xf]
    %v61 = vld [vmem:[%s0 + $0x14] sm:$0xf]
    %v62 = vld [vmem:[%s0 + $0x18] sm:$0xf]
    %v63 = vld [vmem:[%s0 + $0x1c] sm:$0xf]
    %v64 = vld [vmem:[%s0 + $0x20] sm:$0xf]
    %v65 = vld [vmem:[%s0 + $0x24] sm:$0xf]
    %v66 = vld [vmem:[%s0 + $0x28] sm:$0xf]
    %v67 = vld [vmem:[%s0 + $0x2c] sm:$0xf]
    %v68 = vld [vmem:[%s0 + $0x30] sm:$0xf]
    %v69 = vld [vmem:[%s0 + $0x34] sm:$0xf]
    %v70 = vld [vmem:[%s0 + $0x38] sm:$0xf]
    %v71 = vld [vmem:[%s0 + $0x3c] sm:$0xf]
    %v72 = vld [vmem:[%s1] sm:$0xff]
    %v73 = vld [vmem:[%s1 + $0x8] sm:$0xff]
    %v74 = vld [vmem:[%s2] sm:$0xf]
    %v76 = vlaneseq
    %v77 = vshrl.u32 %v76, 7
    %v78 = vsub.s32 0, %v77
    %v79 = vrot.slane %v74, %v78
    %v80 = vlaneseq
    %v81 = vshrl.u32 %v80, 7
    %v82 = vsub.s32 1, %v81
    %v83 = vrot.slane %v74, %v82
    %v84 = vlaneseq
    %v85 = vshrl.u32 %v84, 7
    %v86 = vsub.s32 2, %v85
    %v87 = vrot.slane %v74, %v86
    %v88 = vlaneseq
    %v89 = vshrl.u32 %v88, 7
    %v90 = vsub.s32 3, %v89
    %v91 = vrot.slane %v74, %v90
    %v112 = vunpack.c.l.b16 %v56
    %v113 = vunpack.c.l.b16 %v57
    %v114 = vunpack.c.l.b16 %v58
    %v115 = vunpack.c.l.b16 %v59
    %v116 = vunpack.c.l.b16 %v60
    %v117 = vunpack.c.l.b16 %v61
    %v118 = vunpack.c.l.b16 %v62
    %v119 = vunpack.c.l.b16 %v63
    %v120 = vunpack.c.l.b16 %v64
    %v121 = vunpack.c.l.b16 %v65
    %v122 = vunpack.c.l.b16 %v66
    %v123 = vunpack.c.l.b16 %v67
    %v124 = vunpack.c.l.b16 %v68
    %v125 = vunpack.c.l.b16 %v69
    %v126 = vunpack.c.l.b16 %v70
    %v127 = vunpack.c.l.b16 %v71
    %v128 = vpack.c.b16 %v113, %v112
    %v129 = vpack.c.b16 %v115, %v114
    %v130 = vpack.c.b16 %v117, %v116
    %v131 = vpack.c.b16 %v119, %v118
    %v132 = vpack.c.b16 %v121, %v120
    %v133 = vpack.c.b16 %v123, %v122
    %v134 = vpack.c.b16 %v125, %v124
    %v135 = vpack.c.b16 %v127, %v126
    %v138 = vunpack.c.l.b16 %v72
    %v139 = vunpack.c.h.b16 %v72
    %v140 = vunpack.c.l.b16 %v73
    %v141 = vunpack.c.h.b16 %v73
    %v142 = vpack.c.b16 %v138, %v138
    %v143 = vpack.c.b16 %v139, %v139
    %v144 = vpack.c.b16 %v140, %v140
    %v145 = vpack.c.b16 %v141, %v141
    %vm146 = vcmask 64512
    %v148 = vsel %vm146, %v128, 0
    %v151 = vsel %vm146, %v129, 0
    %v154 = vsel %vm146, %v130, 0
    %v157 = vsel %vm146, %v131, 0
    %v160 = vsel %vm146, %v132, 0
    %v163 = vsel %vm146, %v133, 0
    %v166 = vsel %vm146, %v134, 0
    %v169 = vsel %vm146, %v135, 0
    %vm171 = vcmask 1043456
    %v173 = vsel %vm171, %v142, 0
    %v176 = vsel %vm171, %v143, 0
    %v179 = vsel %vm171, %v144, 0
    %v182 = vsel %vm171, %v145, 0
    %184 = vmatprep.subr.bf16.mxu0 %v176
    %185 = vmatpush1.bf16.msra.mxu0 %v173
    %186 = vmatprep.subr.bf16.mxu0 0
    %187 = vmatpush1.bf16.msra.mxu0 0
    %188 = vmatprep.subr.bf16.mxu0 0
    %189 = vmatpush1.bf16.msra.mxu0 0
    %190 = vmatprep.subr.bf16.mxu0 0
    %191 = vmatpush1.bf16.msra.mxu0 0
    %192 = vmatprep.subr.bf16.mxu0 0
    %193 = vmatpush1.bf16.msra.mxu0 0
    %194 = vmatprep.subr.bf16.mxu0 0
    %195 = vmatpush1.bf16.msra.mxu0 0
    %196 = vmatprep.subr.bf16.mxu0 0
    %197 = vmatpush1.bf16.msra.mxu0 0
    %198 = vmatprep.subr.bf16.mxu0 0
    %199 = vmatpush1.bf16.msra.mxu0 0
    %200 = vmatprep.subr.bf16.mxu0 0
    %201 = vmatpush1.bf16.msra.mxu0 0
    %202 = vmatprep.subr.bf16.mxu0 0
    %203 = vmatpush1.bf16.msra.mxu0 0
    %204 = vmatprep.subr.bf16.mxu0 0
    %205 = vmatpush1.bf16.msra.mxu0 0
    %206 = vmatprep.subr.bf16.mxu0 0
    %207 = vmatpush1.bf16.msra.mxu0 0
    %208 = vmatprep.subr.bf16.mxu0 0
    %209 = vmatpush1.bf16.msra.mxu0 0
    %210 = vmatprep.subr.bf16.mxu0 0
    %211 = vmatpush1.bf16.msra.mxu0 0
    %212 = vmatprep.subr.bf16.mxu0 0
    %213 = vmatpush1.bf16.msra.mxu0 0
    %214 = vmatprep.subr.bf16.mxu0 0
    %215 = vmatpush1.bf16.msra.mxu0 0
    %216 = vmatprep.mubr.bf16.mxu0 0
    %217 = vmatmul.mubr.bf16.gmra.mrb[0].mxu0 %v148
    %v218 = vpop.f32.mrb[0].mxu0
    %v219 = vadd.f32 %v79, %v218
    %v220 = vpop.f32.mrb[0].mxu0
    %v221 = vadd.f32 %v83, %v220
    %v222 = vpop.f32.mrb[0].mxu0
    %v223 = vadd.f32 %v79, %v222
    %v224 = vpop.f32.mrb[0].mxu0
    %v225 = vadd.f32 %v83, %v224
    %226 = vmatprep.mubr.bf16.mxu0 0
    %227 = vmatmul.mubr.bf16.gmra.mrb[0].mxu0 %v151
    %v228 = vpop.f32.mrb[0].mxu0
    %v229 = vadd.f32 %v79, %v228
    %v230 = vpop.f32.mrb[0].mxu0
    %v231 = vadd.f32 %v83, %v230
    %v232 = vpop.f32.mrb[0].mxu0
    %v233 = vadd.f32 %v79, %v232
    %v234 = vpop.f32.mrb[0].mxu0
    %v235 = vadd.f32 %v83, %v234
    %236 = vmatprep.mubr.bf16.mxu0 0
    %237 = vmatmul.mubr.bf16.gmra.mrb[0].mxu0 %v154
    %v238 = vpop.f32.mrb[0].mxu0
    %v239 = vadd.f32 %v79, %v238
    %v240 = vpop.f32.mrb[0].mxu0
    %v241 = vadd.f32 %v83, %v240
    %v242 = vpop.f32.mrb[0].mxu0
    %v243 = vadd.f32 %v79, %v242
    %v244 = vpop.f32.mrb[0].mxu0
    %v245 = vadd.f32 %v83, %v244
    %246 = vmatprep.mubr.bf16.mxu0 0
    %247 = vmatmul.mubr.bf16.gmra.mrb[0].mxu0 %v157
    %v248 = vpop.f32.mrb[0].mxu0
    %v249 = vadd.f32 %v79, %v248
    %v250 = vpop.f32.mrb[0].mxu0
    %v251 = vadd.f32 %v83, %v250
    %v252 = vpop.f32.mrb[0].mxu0
    %v253 = vadd.f32 %v79, %v252
    %v254 = vpop.f32.mrb[0].mxu0
    %v255 = vadd.f32 %v83, %v254
    %256 = vmatprep.mubr.bf16.mxu0 0
    %257 = vmatmul.mubr.bf16.gmra.mrb[0].mxu0 %v160
    %v258 = vpop.f32.mrb[0].mxu0
    %v259 = vadd.f32 %v79, %v258
    %v260 = vpop.f32.mrb[0].mxu0
    %v261 = vadd.f32 %v83, %v260
    %v262 = vpop.f32.mrb[0].mxu0
    %v263 = vadd.f32 %v79, %v262
    %v264 = vpop.f32.mrb[0].mxu0
    %v265 = vadd.f32 %v83, %v264
    %266 = vmatprep.mubr.bf16.mxu0 0
    %267 = vmatmul.mubr.bf16.gmra.mrb[0].mxu0 %v163
    %v268 = vpop.f32.mrb[0].mxu0
    %v269 = vadd.f32 %v79, %v268
    %v270 = vpop.f32.mrb[0].mxu0
    %v271 = vadd.f32 %v83, %v270
    %v272 = vpop.f32.mrb[0].mxu0
    %v273 = vadd.f32 %v79, %v272
    %v274 = vpop.f32.mrb[0].mxu0
    %v275 = vadd.f32 %v83, %v274
    %276 = vmatprep.mubr.bf16.mxu0 0
    %277 = vmatmul.mubr.bf16.gmra.mrb[0].mxu0 %v166
    %v278 = vpop.f32.mrb[0].mxu0
    %v279 = vadd.f32 %v79, %v278
    %v280 = vpop.f32.mrb[0].mxu0
    %v281 = vadd.f32 %v83, %v280
    %v282 = vpop.f32.mrb[0].mxu0
    %v283 = vadd.f32 %v79, %v282
    %v284 = vpop.f32.mrb[0].mxu0
    %v285 = vadd.f32 %v83, %v284
    %286 = vmatprep.mubr.bf16.mxu0 0
    %287 = vmatmul.mubr.bf16.gmra.mrb[0].mxu0 %v169
    %v288 = vpop.f32.mrb[0].mxu0
    %v289 = vadd.f32 %v79, %v288
    %v290 = vpop.f32.mrb[0].mxu0
    %v291 = vadd.f32 %v83, %v290
    %v292 = vpop.f32.mrb[0].mxu0
    %v293 = vadd.f32 %v79, %v292
    %v294 = vpop.f32.mrb[0].mxu0
    %v295 = vadd.f32 %v83, %v294
    %296 = vdwg.mxu0
    %297 = vmatprep.subr.bf16.mxu0 %v182
    %298 = vmatpush1.bf16.msra.mxu0 %v179
    %299 = vmatprep.subr.bf16.mxu0 0
    %300 = vmatpush1.bf16.msra.mxu0 0
    %301 = vmatprep.subr.bf16.mxu0 0
    %302 = vmatpush1.bf16.msra.mxu0 0
    %303 = vmatprep.subr.bf16.mxu0 0
    %304 = vmatpush1.bf16.msra.mxu0 0
    %305 = vmatprep.subr.bf16.mxu0 0
    %306 = vmatpush1.bf16.msra.mxu0 0
    %307 = vmatprep.subr.bf16.mxu0 0
    %308 = vmatpush1.bf16.msra.mxu0 0
    %309 = vmatprep.subr.bf16.mxu0 0
    %310 = vmatpush1.bf16.msra.mxu0 0
    %311 = vmatprep.subr.bf16.mxu0 0
    %312 = vmatpush1.bf16.msra.mxu0 0
    %313 = vmatprep.subr.bf16.mxu0 0
    %314 = vmatpush1.bf16.msra.mxu0 0
    %315 = vmatprep.subr.bf16.mxu0 0
    %316 = vmatpush1.bf16.msra.mxu0 0
    %317 = vmatprep.subr.bf16.mxu0 0
    %318 = vmatpush1.bf16.msra.mxu0 0
    %319 = vmatprep.subr.bf16.mxu0 0
    %320 = vmatpush1.bf16.msra.mxu0 0
    %321 = vmatprep.subr.bf16.mxu0 0
    %322 = vmatpush1.bf16.msra.mxu0 0
    %323 = vmatprep.subr.bf16.mxu0 0
    %324 = vmatpush1.bf16.msra.mxu0 0
    %325 = vmatprep.subr.bf16.mxu0 0
    %326 = vmatpush1.bf16.msra.mxu0 0
    %327 = vmatprep.subr.bf16.mxu0 0
    %328 = vmatpush1.bf16.msra.mxu0 0
    %329 = vmatprep.mubr.bf16.mxu0 0
    %330 = vmatmul.mubr.bf16.gmra.mrb[0].mxu0 %v148
    %v331 = vpop.f32.mrb[0].mxu0
    %v332 = vadd.f32 %v87, %v331
    %v333 = vpop.f32.mrb[0].mxu0
    %v334 = vadd.f32 %v91, %v333
    %v335 = vpop.f32.mrb[0].mxu0
    %v336 = vadd.f32 %v87, %v335
    %v337 = vpop.f32.mrb[0].mxu0
    %v338 = vadd.f32 %v91, %v337
    %339 = vmatprep.mubr.bf16.mxu0 0
    %340 = vmatmul.mubr.bf16.gmra.mrb[0].mxu0 %v151
    %v341 = vpop.f32.mrb[0].mxu0
    %v342 = vadd.f32 %v87, %v341
    %v343 = vpop.f32.mrb[0].mxu0
    %v344 = vadd.f32 %v91, %v343
    %v345 = vpop.f32.mrb[0].mxu0
    %v346 = vadd.f32 %v87, %v345
    %v347 = vpop.f32.mrb[0].mxu0
    %v348 = vadd.f32 %v91, %v347
    %349 = vmatprep.mubr.bf16.mxu0 0
    %350 = vmatmul.mubr.bf16.gmra.mrb[0].mxu0 %v154
    %v351 = vpop.f32.mrb[0].mxu0
    %v352 = vadd.f32 %v87, %v351
    %v353 = vpop.f32.mrb[0].mxu0
    %v354 = vadd.f32 %v91, %v353
    %v355 = vpop.f32.mrb[0].mxu0
    %v356 = vadd.f32 %v87, %v355
    %v357 = vpop.f32.mrb[0].mxu0
    %v358 = vadd.f32 %v91, %v357
    %359 = vmatprep.mubr.bf16.mxu0 0
    %360 = vmatmul.mubr.bf16.gmra.mrb[0].mxu0 %v157
    %v361 = vpop.f32.mrb[0].mxu0
    %v362 = vadd.f32 %v87, %v361
    %v363 = vpop.f32.mrb[0].mxu0
    %v364 = vadd.f32 %v91, %v363
    %v365 = vpop.f32.mrb[0].mxu0
    %v366 = vadd.f32 %v87, %v365
    %v367 = vpop.f32.mrb[0].mxu0
    %v368 = vadd.f32 %v91, %v367
    %369 = vmatprep.mubr.bf16.mxu0 0
    %370 = vmatmul.mubr.bf16.gmra.mrb[0].mxu0 %v160
    %v371 = vpop.f32.mrb[0].mxu0
    %v372 = vadd.f32 %v87, %v371
    %v373 = vpop.f32.mrb[0].mxu0
    %v374 = vadd.f32 %v91, %v373
    %v375 = vpop.f32.mrb[0].mxu0
    %v376 = vadd.f32 %v87, %v375
    %v377 = vpop.f32.mrb[0].mxu0
    %v378 = vadd.f32 %v91, %v377
    %379 = vmatprep.mubr.bf16.mxu0 0
    %380 = vmatmul.mubr.bf16.gmra.mrb[0].mxu0 %v163
    %v381 = vpop.f32.mrb[0].mxu0
    %v382 = vadd.f32 %v87, %v381
    %v383 = vpop.f32.mrb[0].mxu0
    %v384 = vadd.f32 %v91, %v383
    %v385 = vpop.f32.mrb[0].mxu0
    %v386 = vadd.f32 %v87, %v385
    %v387 = vpop.f32.mrb[0].mxu0
    %v388 = vadd.f32 %v91, %v387
    %389 = vmatprep.mubr.bf16.mxu0 0
    %390 = vmatmul.mubr.bf16.gmra.mrb[0].mxu0 %v166
    %v391 = vpop.f32.mrb[0].mxu0
    %v392 = vadd.f32 %v87, %v391
    %v393 = vpop.f32.mrb[0].mxu0
    %v394 = vadd.f32 %v91, %v393
    %v395 = vpop.f32.mrb[0].mxu0
    %v396 = vadd.f32 %v87, %v395
    %v397 = vpop.f32.mrb[0].mxu0
    %v398 = vadd.f32 %v91, %v397
    %399 = vmatprep.mubr.bf16.mxu0 0
    %400 = vmatmul.mubr.bf16.gmra.mrb[0].mxu0 %v169
    %v401 = vpop.f32.mrb[0].mxu0
    %v402 = vadd.f32 %v87, %v401
    %v403 = vpop.f32.mrb[0].mxu0
    %v404 = vadd.f32 %v91, %v403
    %v405 = vpop.f32.mrb[0].mxu0
    %v406 = vadd.f32 %v87, %v405
    %v407 = vpop.f32.mrb[0].mxu0
    %v408 = vadd.f32 %v91, %v407
    %409 = vdwg.mxu0
    %v410 = vmax.f32 %v219, 0.0
    %v411 = vmax.f32 %v221, 0.0
    %v412 = vmax.f32 %v332, 0.0
    %v413 = vmax.f32 %v334, 0.0
    %v414 = vmax.f32 %v223, 0.0
    %v415 = vmax.f32 %v225, 0.0
    %v416 = vmax.f32 %v336, 0.0
    %v417 = vmax.f32 %v338, 0.0
    %v418 = vmax.f32 %v229, 0.0
    %v419 = vmax.f32 %v231, 0.0
    %v420 = vmax.f32 %v342, 0.0
    %v421 = vmax.f32 %v344, 0.0
    %v422 = vmax.f32 %v233, 0.0
    %v423 = vmax.f32 %v235, 0.0
    %v424 = vmax.f32 %v346, 0.0
    %v425 = vmax.f32 %v348, 0.0
    %v426 = vmax.f32 %v239, 0.0
    %v427 = vmax.f32 %v241, 0.0
    %v428 = vmax.f32 %v352, 0.0
    %v429 = vmax.f32 %v354, 0.0
    %v430 = vmax.f32 %v243, 0.0
    %v431 = vmax.f32 %v245, 0.0
    %v432 = vmax.f32 %v356, 0.0
    %v433 = vmax.f32 %v358, 0.0
    %v434 = vmax.f32 %v249, 0.0
    %v435 = vmax.f32 %v251, 0.0
    %v436 = vmax.f32 %v362, 0.0
    %v437 = vmax.f32 %v364, 0.0
    %v438 = vmax.f32 %v253, 0.0
    %v439 = vmax.f32 %v255, 0.0
    %v440 = vmax.f32 %v366, 0.0
    %v441 = vmax.f32 %v368, 0.0
    %v442 = vmax.f32 %v259, 0.0
    %v443 = vmax.f32 %v261, 0.0
    %v444 = vmax.f32 %v372, 0.0
    %v445 = vmax.f32 %v374, 0.0
    %v446 = vmax.f32 %v263, 0.0
    %v447 = vmax.f32 %v265, 0.0
    %v448 = vmax.f32 %v376, 0.0
    %v449 = vmax.f32 %v378, 0.0
    %v450 = vmax.f32 %v269, 0.0
    %v451 = vmax.f32 %v271, 0.0
    %v452 = vmax.f32 %v382, 0.0
    %v453 = vmax.f32 %v384, 0.0
    %v454 = vmax.f32 %v273, 0.0
    %v455 = vmax.f32 %v275, 0.0
    %v456 = vmax.f32 %v386, 0.0
    %v457 = vmax.f32 %v388, 0.0
    %v458 = vmax.f32 %v279, 0.0
    %v459 = vmax.f32 %v281, 0.0
    %v460 = vmax.f32 %v392, 0.0
    %v461 = vmax.f32 %v394, 0.0
    %v462 = vmax.f32 %v283, 0.0
    %v463 = vmax.f32 %v285, 0.0
    %v464 = vmax.f32 %v396, 0.0
    %v465 = vmax.f32 %v398, 0.0
    %v466 = vmax.f32 %v289, 0.0
    %v467 = vmax.f32 %v291, 0.0
    %v468 = vmax.f32 %v402, 0.0
    %v469 = vmax.f32 %v404, 0.0
    %v470 = vmax.f32 %v293, 0.0
    %v471 = vmax.f32 %v295, 0.0
    %v472 = vmax.f32 %v406, 0.0
    %v473 = vmax.f32 %v408, 0.0
    %v474 = vpack.c.bf16 %v414, %v410
    %v475 = vpack.c.bf16 %v415, %v411
    %v476 = vpack.c.bf16 %v416, %v412
    %v477 = vpack.c.bf16 %v417, %v413
    %v478 = vpack.c.bf16 %v422, %v418
    %v479 = vpack.c.bf16 %v423, %v419
    %v480 = vpack.c.bf16 %v424, %v420
    %v481 = vpack.c.bf16 %v425, %v421
    %v482 = vpack.c.bf16 %v430, %v426
    %v483 = vpack.c.bf16 %v431, %v427
    %v484 = vpack.c.bf16 %v432, %v428
    %v485 = vpack.c.bf16 %v433, %v429
    %v486 = vpack.c.bf16 %v438, %v434
    %v487 = vpack.c.bf16 %v439, %v435
    %v488 = vpack.c.bf16 %v440, %v436
    %v489 = vpack.c.bf16 %v441, %v437
    %v490 = vpack.c.bf16 %v446, %v442
    %v491 = vpack.c.bf16 %v447, %v443
    %v492 = vpack.c.bf16 %v448, %v444
    %v493 = vpack.c.bf16 %v449, %v445
    %v494 = vpack.c.bf16 %v454, %v450
    %v495 = vpack.c.bf16 %v455, %v451
    %v496 = vpack.c.bf16 %v456, %v452
    %v497 = vpack.c.bf16 %v457, %v453
    %v498 = vpack.c.bf16 %v462, %v458
    %v499 = vpack.c.bf16 %v463, %v459
    %v500 = vpack.c.bf16 %v464, %v460
    %v501 = vpack.c.bf16 %v465, %v461
    %v502 = vpack.c.bf16 %v470, %v466
    %v503 = vpack.c.bf16 %v471, %v467
    %v504 = vpack.c.bf16 %v472, %v468
    %v505 = vpack.c.bf16 %v473, %v469
    %v506 = vld [vmem:[#allocation2] sm:$0xff]
    %v507 = vld [vmem:[#allocation2 + $0x8] sm:$0xf]
    %v508 = vld [vmem:[#allocation2 + $0xc] sm:$0xff]
    %v509 = vld [vmem:[#allocation2 + $0x14] sm:$0xf]
    %v510 = vld [vmem:[#allocation2 + $0x18] sm:$0xff]
    %v511 = vld [vmem:[#allocation2 + $0x20] sm:$0xf]
    %v512 = vld [vmem:[#allocation2 + $0x24] sm:$0xff]
    %v513 = vld [vmem:[#allocation2 + $0x2c] sm:$0xf]
    %v514 = vld [vmem:[#allocation2 + $0x30] sm:$0xff]
    %v515 = vld [vmem:[#allocation2 + $0x38] sm:$0xf]
    %v516 = vld [vmem:[#allocation2 + $0x3c] sm:$0xff]
    %v517 = vld [vmem:[#allocation2 + $0x44] sm:$0xf]
    %v518 = vld [vmem:[#allocation2 + $0x48] sm:$0xff]
    %v519 = vld [vmem:[#allocation2 + $0x50] sm:$0xf]
    %v520 = vld [vmem:[#allocation2 + $0x54] sm:$0xff]
    %v521 = vld [vmem:[#allocation2 + $0x5c] sm:$0xf]
    %v522 = vld [vmem:[#allocation2 + $0x60] sm:$0xff]
    %v523 = vld [vmem:[#allocation2 + $0x68] sm:$0xf]
    %v524 = vld [vmem:[#allocation2 + $0x6c] sm:$0xff]
    %v525 = vld [vmem:[#allocation2 + $0x74] sm:$0xf]
    %v526 = vld [vmem:[#allocation2 + $0x78] sm:$0xff]
    %v527 = vld [vmem:[#allocation2 + $0x80] sm:$0xf]
    %v528 = vld [vmem:[#allocation2 + $0x84] sm:$0xff]
    %v529 = vld [vmem:[#allocation2 + $0x8c] sm:$0xf]
    %v530 = vld [vmem:[#allocation2 + $0x90] sm:$0xff]
    %v531 = vld [vmem:[#allocation2 + $0x98] sm:$0xf]
    %v532 = vld [vmem:[#allocation2 + $0x9c] sm:$0xff]
    %v533 = vld [vmem:[#allocation2 + $0xa4] sm:$0xf]
    %v534 = vld [vmem:[#allocation2 + $0xa8] sm:$0xff]
    %v535 = vld [vmem:[#allocation2 + $0xb0] sm:$0xf]
    %v536 = vld [vmem:[#allocation2 + $0xb4] sm:$0xff]
    %v537 = vld [vmem:[#allocation2 + $0xbc] sm:$0xf]
    %v538 = vld [vmem:[#allocation2 + $0xc0] sm:$0xff]
    %v539 = vld [vmem:[#allocation2 + $0xc8] sm:$0xf]
    %v540 = vld [vmem:[#allocation2 + $0xcc] sm:$0xff]
    %v541 = vld [vmem:[#allocation2 + $0xd4] sm:$0xf]
    %v542 = vld [vmem:[#allocation2 + $0xd8] sm:$0xff]
    %v543 = vld [vmem:[#allocation2 + $0xe0] sm:$0xf]
    %v544 = vld [vmem:[#allocation2 + $0xe4] sm:$0xff]
    %v545 = vld [vmem:[#allocation2 + $0xec] sm:$0xf]
    %v546 = vld [vmem:[#allocation2 + $0xf0] sm:$0xff]
    %v547 = vld [vmem:[#allocation2 + $0xf8] sm:$0xf]
    %v548 = vld [vmem:[#allocation2 + $0xfc] sm:$0xff]
    %v549 = vld [vmem:[#allocation2 + $0x104] sm:$0xf]
    %v550 = vld [vmem:[#allocation2 + $0x108] sm:$0xff]
    %v551 = vld [vmem:[#allocation2 + $0x110] sm:$0xf]
    %v552 = vld [vmem:[#allocation2 + $0x114] sm:$0xff]
    %v553 = vld [vmem:[#allocation2 + $0x11c] sm:$0xf]
    %v554 = vld [vmem:[#allocation2 + $0x120] sm:$0xff]
    %v555 = vld [vmem:[#allocation2 + $0x128] sm:$0xf]
    %v556 = vld [vmem:[#allocation2 + $0x12c] sm:$0xff]
    %v557 = vld [vmem:[#allocation2 + $0x134] sm:$0xf]
    %v558 = vld [vmem:[#allocation2 + $0x138] sm:$0xff]
    %v559 = vld [vmem:[#allocation2 + $0x140] sm:$0xf]
    %v560 = vld [vmem:[#allocation2 + $0x144] sm:$0xff]
    %v561 = vld [vmem:[#allocation2 + $0x14c] sm:$0xf]
    %v562 = vld [vmem:[#allocation2 + $0x150] sm:$0xff]
    %v563 = vld [vmem:[#allocation2 + $0x158] sm:$0xf]
    %v564 = vld [vmem:[#allocation2 + $0x15c] sm:$0xff]
    %v565 = vld [vmem:[#allocation2 + $0x164] sm:$0xf]
    %v566 = vld [vmem:[#allocation2 + $0x168] sm:$0xff]
    %v567 = vld [vmem:[#allocation2 + $0x170] sm:$0xf]
    %v568 = vld [vmem:[#allocation2 + $0x174] sm:$0xff]
    %v569 = vld [vmem:[#allocation2 + $0x17c] sm:$0xf]
    %v570 = vld [vmem:[#allocation2 + $0x180] sm:$0xff]
    %v571 = vld [vmem:[#allocation2 + $0x188] sm:$0xf]
    %v572 = vld [vmem:[#allocation2 + $0x18c] sm:$0xff]
    %v573 = vld [vmem:[#allocation2 + $0x194] sm:$0xf]
    %v574 = vld [vmem:[#allocation2 + $0x198] sm:$0xff]
    %v575 = vld [vmem:[#allocation2 + $0x1a0] sm:$0xf]
    %v576 = vld [vmem:[#allocation2 + $0x1a4] sm:$0xff]
    %v577 = vld [vmem:[#allocation2 + $0x1ac] sm:$0xf]
    %v578 = vld [vmem:[#allocation2 + $0x1b0] sm:$0xff]
    %v579 = vld [vmem:[#allocation2 + $0x1b8] sm:$0xf]
    %v580 = vld [vmem:[#allocation2 + $0x1bc] sm:$0xff]
    %v581 = vld [vmem:[#allocation2 + $0x1c4] sm:$0xf]
    %v582 = vld [vmem:[#allocation2 + $0x1c8] sm:$0xff]
    %v583 = vld [vmem:[#allocation2 + $0x1d0] sm:$0xf]
    %v584 = vld [vmem:[#allocation2 + $0x1d4] sm:$0xff]
    %v585 = vld [vmem:[#allocation2 + $0x1dc] sm:$0xf]
    %v586 = vld [vmem:[#allocation2 + $0x1e0] sm:$0xff]
    %v587 = vld [vmem:[#allocation2 + $0x1e8] sm:$0xf]
    %v588 = vld [vmem:[#allocation2 + $0x1ec] sm:$0xff]
    %v589 = vld [vmem:[#allocation2 + $0x1f4] sm:$0xf]
    %v590 = vld [vmem:[#allocation2 + $0x1f8] sm:$0xff]
    %v591 = vld [vmem:[#allocation2 + $0x200] sm:$0xf]
    %v592 = vld [vmem:[#allocation2 + $0x204] sm:$0xff]
    %v593 = vld [vmem:[#allocation2 + $0x20c] sm:$0xf]
    %v594 = vld [vmem:[#allocation2 + $0x210] sm:$0xff]
    %v595 = vld [vmem:[#allocation2 + $0x218] sm:$0xf]
    %v596 = vld [vmem:[#allocation2 + $0x21c] sm:$0xff]
    %v597 = vld [vmem:[#allocation2 + $0x224] sm:$0xf]
    %v598 = vld [vmem:[#allocation2 + $0x228] sm:$0xff]
    %v599 = vld [vmem:[#allocation2 + $0x230] sm:$0xf]
    %v600 = vld [vmem:[#allocation2 + $0x234] sm:$0xff]
    %v601 = vld [vmem:[#allocation2 + $0x23c] sm:$0xf]
    %v602 = vld [vmem:[#allocation2 + $0x240] sm:$0xff]
    %v603 = vld [vmem:[#allocation2 + $0x248] sm:$0xf]
    %v604 = vld [vmem:[#allocation2 + $0x24c] sm:$0xff]
    %v605 = vld [vmem:[#allocation2 + $0x254] sm:$0xf]
    %v606 = vld [vmem:[#allocation2 + $0x258] sm:$0xff]
    %v607 = vld [vmem:[#allocation2 + $0x260] sm:$0xf]
    %v608 = vld [vmem:[#allocation2 + $0x264] sm:$0xff]
    %v609 = vld [vmem:[#allocation2 + $0x26c] sm:$0xf]
    %v610 = vld [vmem:[#allocation2 + $0x270] sm:$0xff]
    %v611 = vld [vmem:[#allocation2 + $0x278] sm:$0xf]
    %v612 = vld [vmem:[#allocation2 + $0x27c] sm:$0xff]
    %v613 = vld [vmem:[#allocation2 + $0x284] sm:$0xf]
    %v614 = vld [vmem:[#allocation2 + $0x288] sm:$0xff]
    %v615 = vld [vmem:[#allocation2 + $0x290] sm:$0xf]
    %v616 = vld [vmem:[#allocation2 + $0x294] sm:$0xff]
    %v617 = vld [vmem:[#allocation2 + $0x29c] sm:$0xf]
    %v618 = vld [vmem:[#allocation2 + $0x2a0] sm:$0xff]
    %v619 = vld [vmem:[#allocation2 + $0x2a8] sm:$0xf]
    %v620 = vld [vmem:[#allocation2 + $0x2ac] sm:$0xff]
    %v621 = vld [vmem:[#allocation2 + $0x2b4] sm:$0xf]
    %v622 = vld [vmem:[#allocation2 + $0x2b8] sm:$0xff]
    %v623 = vld [vmem:[#allocation2 + $0x2c0] sm:$0xf]
    %v624 = vld [vmem:[#allocation2 + $0x2c4] sm:$0xff]
    %v625 = vld [vmem:[#allocation2 + $0x2cc] sm:$0xf]
    %v626 = vld [vmem:[#allocation2 + $0x2d0] sm:$0xff]
    %v627 = vld [vmem:[#allocation2 + $0x2d8] sm:$0xf]
    %v628 = vld [vmem:[#allocation2 + $0x2dc] sm:$0xff]
    %v629 = vld [vmem:[#allocation2 + $0x2e4] sm:$0xf]
    %v630 = vld [vmem:[#allocation2 + $0x2e8] sm:$0xff]
    %v631 = vld [vmem:[#allocation2 + $0x2f0] sm:$0xf]
    %v632 = vld [vmem:[#allocation2 + $0x2f4] sm:$0xff]
    %v633 = vld [vmem:[#allocation2 + $0x2fc] sm:$0xf]
    %v634 = vld [vmem:[%s4] sm:$0x7]
    %v636 = vlaneseq
    %v637 = vshrl.u32 %v636, 7
    %v638 = vsub.s32 0, %v637
    %v639 = vrot.slane %v634, %v638
    %v640 = vlaneseq
    %v641 = vshrl.u32 %v640, 7
    %v642 = vsub.s32 1, %v641
    %v643 = vrot.slane %v634, %v642
    %v644 = vlaneseq
    %v645 = vshrl.u32 %v644, 7
    %v646 = vsub.s32 2, %v645
    %v647 = vrot.slane %v634, %v646
    %v779 = vunpack.c.l.b16 %v506
    %v780 = vunpack.c.h.b16 %v506
    %v781 = vunpack.c.l.b16 %v507
    %v782 = vunpack.c.l.b16 %v508
    %v783 = vunpack.c.h.b16 %v508
    %v784 = vunpack.c.l.b16 %v509
    %v785 = vunpack.c.l.b16 %v510
    %v786 = vunpack.c.h.b16 %v510
    %v787 = vunpack.c.l.b16 %v511
    %v788 = vunpack.c.l.b16 %v512
    %v789 = vunpack.c.h.b16 %v512
    %v790 = vunpack.c.l.b16 %v513
    %v791 = vunpack.c.l.b16 %v514
    %v792 = vunpack.c.h.b16 %v514
    %v793 = vunpack.c.l.b16 %v515
    %v794 = vunpack.c.l.b16 %v516
    %v795 = vunpack.c.h.b16 %v516
    %v796 = vunpack.c.l.b16 %v517
    %v797 = vunpack.c.l.b16 %v518
    %v798 = vunpack.c.h.b16 %v518
    %v799 = vunpack.c.l.b16 %v519
    %v800 = vunpack.c.l.b16 %v520
    %v801 = vunpack.c.h.b16 %v520
    %v802 = vunpack.c.l.b16 %v521
    %v803 = vunpack.c.l.b16 %v522
    %v804 = vunpack.c.h.b16 %v522
    %v805 = vunpack.c.l.b16 %v523
    %v806 = vunpack.c.l.b16 %v524
    %v807 = vunpack.c.h.b16 %v524
    %v808 = vunpack.c.l.b16 %v525
    %v809 = vunpack.c.l.b16 %v526
    %v810 = vunpack.c.h.b16 %v526
    %v811 = vunpack.c.l.b16 %v527
    %v812 = vunpack.c.l.b16 %v528
    %v813 = vunpack.c.h.b16 %v528
    %v814 = vunpack.c.l.b16 %v529
    %v815 = vunpack.c.l.b16 %v530
    %v816 = vunpack.c.h.b16 %v530
    %v817 = vunpack.c.l.b16 %v531
    %v818 = vunpack.c.l.b16 %v532
    %v819 = vunpack.c.h.b16 %v532
    %v820 = vunpack.c.l.b16 %v533
    %v821 = vunpack.c.l.b16 %v534
    %v822 = vunpack.c.h.b16 %v534
    %v823 = vunpack.c.l.b16 %v535
    %v824 = vunpack.c.l.b16 %v536
    %v825 = vunpack.c.h.b16 %v536
    %v826 = vunpack.c.l.b16 %v537
    %v827 = vunpack.c.l.b16 %v538
    %v828 = vunpack.c.h.b16 %v538
    %v829 = vunpack.c.l.b16 %v539
    %v830 = vunpack.c.l.b16 %v540
    %v831 = vunpack.c.h.b16 %v540
    %v832 = vunpack.c.l.b16 %v541
    %v833 = vunpack.c.l.b16 %v542
    %v834 = vunpack.c.h.b16 %v542
    %v835 = vunpack.c.l.b16 %v543
    %v836 = vunpack.c.l.b16 %v544
    %v837 = vunpack.c.h.b16 %v544
    %v838 = vunpack.c.l.b16 %v545
    %v839 = vunpack.c.l.b16 %v546
    %v840 = vunpack.c.h.b16 %v546
    %v841 = vunpack.c.l.b16 %v547
    %v842 = vunpack.c.l.b16 %v548
    %v843 = vunpack.c.h.b16 %v548
    %v844 = vunpack.c.l.b16 %v549
    %v845 = vunpack.c.l.b16 %v550
    %v846 = vunpack.c.h.b16 %v550
    %v847 = vunpack.c.l.b16 %v551
    %v848 = vunpack.c.l.b16 %v552
    %v849 = vunpack.c.h.b16 %v552
    %v850 = vunpack.c.l.b16 %v553
    %v851 = vunpack.c.l.b16 %v554
    %v852 = vunpack.c.h.b16 %v554
    %v853 = vunpack.c.l.b16 %v555
    %v854 = vunpack.c.l.b16 %v556
    %v855 = vunpack.c.h.b16 %v556
    %v856 = vunpack.c.l.b16 %v557
    %v857 = vunpack.c.l.b16 %v558
    %v858 = vunpack.c.h.b16 %v558
    %v859 = vunpack.c.l.b16 %v559
    %v860 = vunpack.c.l.b16 %v560
    %v861 = vunpack.c.h.b16 %v560
    %v862 = vunpack.c.l.b16 %v561
    %v863 = vunpack.c.l.b16 %v562
    %v864 = vunpack.c.h.b16 %v562
    %v865 = vunpack.c.l.b16 %v563
    %v866 = vunpack.c.l.b16 %v564
    %v867 = vunpack.c.h.b16 %v564
    %v868 = vunpack.c.l.b16 %v565
    %v869 = vunpack.c.l.b16 %v566
    %v870 = vunpack.c.h.b16 %v566
    %v871 = vunpack.c.l.b16 %v567
    %v872 = vunpack.c.l.b16 %v568
    %v873 = vunpack.c.h.b16 %v568
    %v874 = vunpack.c.l.b16 %v569
    %v875 = vunpack.c.l.b16 %v570
    %v876 = vunpack.c.h.b16 %v570
    %v877 = vunpack.c.l.b16 %v571
    %v878 = vunpack.c.l.b16 %v572
    %v879 = vunpack.c.h.b16 %v572
    %v880 = vunpack.c.l.b16 %v573
    %v881 = vunpack.c.l.b16 %v574
    %v882 = vunpack.c.h.b16 %v574
    %v883 = vunpack.c.l.b16 %v575
    %v884 = vunpack.c.l.b16 %v576
    %v885 = vunpack.c.h.b16 %v576
    %v886 = vunpack.c.l.b16 %v577
    %v887 = vunpack.c.l.b16 %v578
    %v888 = vunpack.c.h.b16 %v578
    %v889 = vunpack.c.l.b16 %v579
    %v890 = vunpack.c.l.b16 %v580
    %v891 = vunpack.c.h.b16 %v580
    %v892 = vunpack.c.l.b16 %v581
    %v893 = vunpack.c.l.b16 %v582
    %v894 = vunpack.c.h.b16 %v582
    %v895 = vunpack.c.l.b16 %v583
    %v896 = vunpack.c.l.b16 %v584
    %v897 = vunpack.c.h.b16 %v584
    %v898 = vunpack.c.l.b16 %v585
    %v899 = vunpack.c.l.b16 %v586
    %v900 = vunpack.c.h.b16 %v586
    %v901 = vunpack.c.l.b16 %v587
    %v902 = vunpack.c.l.b16 %v588
    %v903 = vunpack.c.h.b16 %v588
    %v904 = vunpack.c.l.b16 %v589
    %v905 = vunpack.c.l.b16 %v590
    %v906 = vunpack.c.h.b16 %v590
    %v907 = vunpack.c.l.b16 %v591
    %v908 = vunpack.c.l.b16 %v592
    %v909 = vunpack.c.h.b16 %v592
    %v910 = vunpack.c.l.b16 %v593
    %v911 = vunpack.c.l.b16 %v594
    %v912 = vunpack.c.h.b16 %v594
    %v913 = vunpack.c.l.b16 %v595
    %v914 = vunpack.c.l.b16 %v596
    %v915 = vunpack.c.h.b16 %v596
    %v916 = vunpack.c.l.b16 %v597
    %v917 = vunpack.c.l.b16 %v598
    %v918 = vunpack.c.h.b16 %v598
    %v919 = vunpack.c.l.b16 %v599
    %v920 = vunpack.c.l.b16 %v600
    %v921 = vunpack.c.h.b16 %v600
    %v922 = vunpack.c.l.b16 %v601
    %v923 = vunpack.c.l.b16 %v602
    %v924 = vunpack.c.h.b16 %v602
    %v925 = vunpack.c.l.b16 %v603
    %v926 = vunpack.c.l.b16 %v604
    %v927 = vunpack.c.h.b16 %v604
    %v928 = vunpack.c.l.b16 %v605
    %v929 = vunpack.c.l.b16 %v606
    %v930 = vunpack.c.h.b16 %v606
    %v931 = vunpack.c.l.b16 %v607
    %v932 = vunpack.c.l.b16 %v608
    %v933 = vunpack.c.h.b16 %v608
    %v934 = vunpack.c.l.b16 %v609
    %v935 = vunpack.c.l.b16 %v610
    %v936 = vunpack.c.h.b16 %v610
    %v937 = vunpack.c.l.b16 %v611
    %v938 = vunpack.c.l.b16 %v612
    %v939 = vunpack.c.h.b16 %v612
    %v940 = vunpack.c.l.b16 %v613
    %v941 = vunpack.c.l.b16 %v614
    %v942 = vunpack.c.h.b16 %v614
    %v943 = vunpack.c.l.b16 %v615
    %v944 = vunpack.c.l.b16 %v616
    %v945 = vunpack.c.h.b16 %v616
    %v946 = vunpack.c.l.b16 %v617
    %v947 = vunpack.c.l.b16 %v618
    %v948 = vunpack.c.h.b16 %v618
    %v949 = vunpack.c.l.b16 %v619
    %v950 = vunpack.c.l.b16 %v620
    %v951 = vunpack.c.h.b16 %v620
    %v952 = vunpack.c.l.b16 %v621
    %v953 = vunpack.c.l.b16 %v622
    %v954 = vunpack.c.h.b16 %v622
    %v955 = vunpack.c.l.b16 %v623
    %v956 = vunpack.c.l.b16 %v624
    %v957 = vunpack.c.h.b16 %v624
    %v958 = vunpack.c.l.b16 %v625
    %v959 = vunpack.c.l.b16 %v626
    %v960 = vunpack.c.h.b16 %v626
    %v961 = vunpack.c.l.b16 %v627
    %v962 = vunpack.c.l.b16 %v628
    %v963 = vunpack.c.h.b16 %v628
    %v964 = vunpack.c.l.b16 %v629
    %v965 = vunpack.c.l.b16 %v630
    %v966 = vunpack.c.h.b16 %v630
    %v967 = vunpack.c.l.b16 %v631
    %v968 = vunpack.c.l.b16 %v632
    %v969 = vunpack.c.h.b16 %v632
    %v970 = vunpack.c.l.b16 %v633
    %v971 = vpack.c.b16 %v782, %v779
    %v972 = vpack.c.b16 %v783, %v780
    %v973 = vpack.c.b16 %v784, %v781
    %v974 = vpack.c.b16 %v788, %v785
    %v975 = vpack.c.b16 %v789, %v786
    %v976 = vpack.c.b16 %v790, %v787
    %v977 = vpack.c.b16 %v794, %v791
    %v978 = vpack.c.b16 %v795, %v792
    %v979 = vpack.c.b16 %v796, %v793
    %v980 = vpack.c.b16 %v800, %v797
    %v981 = vpack.c.b16 %v801, %v798
    %v982 = vpack.c.b16 %v802, %v799
    %v983 = vpack.c.b16 %v806, %v803
    %v984 = vpack.c.b16 %v807, %v804
    %v985 = vpack.c.b16 %v808, %v805
    %v986 = vpack.c.b16 %v812, %v809
    %v987 = vpack.c.b16 %v813, %v810
    %v988 = vpack.c.b16 %v814, %v811
    %v989 = vpack.c.b16 %v818, %v815
    %v990 = vpack.c.b16 %v819, %v816
    %v991 = vpack.c.b16 %v820, %v817
    %v992 = vpack.c.b16 %v824, %v821
    %v993 = vpack.c.b16 %v825, %v822
    %v994 = vpack.c.b16 %v826, %v823
    %v995 = vpack.c.b16 %v830, %v827
    %v996 = vpack.c.b16 %v831, %v828
    %v997 = vpack.c.b16 %v832, %v829
    %v998 = vpack.c.b16 %v836, %v833
    %v999 = vpack.c.b16 %v837, %v834
    %v1000 = vpack.c.b16 %v838, %v835
    %v1001 = vpack.c.b16 %v842, %v839
    %v1002 = vpack.c.b16 %v843, %v840
    %v1003 = vpack.c.b16 %v844, %v841
    %v1004 = vpack.c.b16 %v848, %v845
    %v1005 = vpack.c.b16 %v849, %v846
    %v1006 = vpack.c.b16 %v850, %v847
    %v1007 = vpack.c.b16 %v854, %v851
    %v1008 = vpack.c.b16 %v855, %v852
    %v1009 = vpack.c.b16 %v856, %v853
    %v1010 = vpack.c.b16 %v860, %v857
    %v1011 = vpack.c.b16 %v861, %v858
    %v1012 = vpack.c.b16 %v862, %v859
    %v1013 = vpack.c.b16 %v866, %v863
    %v1014 = vpack.c.b16 %v867, %v864
    %v1015 = vpack.c.b16 %v868, %v865
    %v1016 = vpack.c.b16 %v872, %v869
    %v1017 = vpack.c.b16 %v873, %v870
    %v1018 = vpack.c.b16 %v874, %v871
    %v1019 = vpack.c.b16 %v878, %v875
    %v1020 = vpack.c.b16 %v879, %v876
    %v1021 = vpack.c.b16 %v880, %v877
    %v1022 = vpack.c.b16 %v884, %v881
    %v1023 = vpack.c.b16 %v885, %v882
    %v1024 = vpack.c.b16 %v886, %v883
    %v1025 = vpack.c.b16 %v890, %v887
    %v1026 = vpack.c.b16 %v891, %v888
    %v1027 = vpack.c.b16 %v892, %v889
    %v1028 = vpack.c.b16 %v896, %v893
    %v1029 = vpack.c.b16 %v897, %v894
    %v1030 = vpack.c.b16 %v898, %v895
    %v1031 = vpack.c.b16 %v902, %v899
    %v1032 = vpack.c.b16 %v903, %v900
    %v1033 = vpack.c.b16 %v904, %v901
    %v1034 = vpack.c.b16 %v908, %v905
    %v1035 = vpack.c.b16 %v909, %v906
    %v1036 = vpack.c.b16 %v910, %v907
    %v1037 = vpack.c.b16 %v914, %v911
    %v1038 = vpack.c.b16 %v915, %v912
    %v1039 = vpack.c.b16 %v916, %v913
    %v1040 = vpack.c.b16 %v920, %v917
    %v1041 = vpack.c.b16 %v921, %v918
    %v1042 = vpack.c.b16 %v922, %v919
    %v1043 = vpack.c.b16 %v926, %v923
    %v1044 = vpack.c.b16 %v927, %v924
    %v1045 = vpack.c.b16 %v928, %v925
    %v1046 = vpack.c.b16 %v932, %v929
    %v1047 = vpack.c.b16 %v933, %v930
    %v1048 = vpack.c.b16 %v934, %v931
    %v1049 = vpack.c.b16 %v938, %v935
    %v1050 = vpack.c.b16 %v939, %v936
    %v1051 = vpack.c.b16 %v940, %v937
    %v1052 = vpack.c.b16 %v944, %v941
    %v1053 = vpack.c.b16 %v945, %v942
    %v1054 = vpack.c.b16 %v946, %v943
    %v1055 = vpack.c.b16 %v950, %v947
    %v1056 = vpack.c.b16 %v951, %v948
    %v1057 = vpack.c.b16 %v952, %v949
    %v1058 = vpack.c.b16 %v956, %v953
    %v1059 = vpack.c.b16 %v957, %v954
    %v1060 = vpack.c.b16 %v958, %v955
    %v1061 = vpack.c.b16 %v962, %v959
    %v1062 = vpack.c.b16 %v963, %v960
    %v1063 = vpack.c.b16 %v964, %v961
    %v1064 = vpack.c.b16 %v968, %v965
    %v1065 = vpack.c.b16 %v969, %v966
    %v1066 = vpack.c.b16 %v970, %v967
    %1163 = vmatprep.subr.bf16.mxu0 %v972
    %1164 = vmatpush1.bf16.msra.mxu0 %v971
    %1165 = vmatprep.subr.bf16.mxu0 %v975
    %1166 = vmatpush1.bf16.msra.mxu0 %v974
    %1167 = vmatprep.subr.bf16.mxu0 %v978
    %1168 = vmatpush1.bf16.msra.mxu0 %v977
    %1169 = vmatprep.subr.bf16.mxu0 %v981
    %1170 = vmatpush1.bf16.msra.mxu0 %v980
    %1171 = vmatprep.subr.bf16.mxu0 %v984
    %1172 = vmatpush1.bf16.msra.mxu0 %v983
    %1173 = vmatprep.subr.bf16.mxu0 %v987
    %1174 = vmatpush1.bf16.msra.mxu0 %v986
    %1175 = vmatprep.subr.bf16.mxu0 %v990
    %1176 = vmatpush1.bf16.msra.mxu0 %v989
    %1177 = vmatprep.subr.bf16.mxu0 %v993
    %1178 = vmatpush1.bf16.msra.mxu0 %v992
    %1179 = vmatprep.subr.bf16.mxu0 %v996
    %1180 = vmatpush1.bf16.msra.mxu0 %v995
    %1181 = vmatprep.subr.bf16.mxu0 %v999
    %1182 = vmatpush1.bf16.msra.mxu0 %v998
    %1183 = vmatprep.subr.bf16.mxu0 %v1002
    %1184 = vmatpush1.bf16.msra.mxu0 %v1001
    %1185 = vmatprep.subr.bf16.mxu0 %v1005
    %1186 = vmatpush1.bf16.msra.mxu0 %v1004
    %1187 = vmatprep.subr.bf16.mxu0 %v1008
    %1188 = vmatpush1.bf16.msra.mxu0 %v1007
    %1189 = vmatprep.subr.bf16.mxu0 %v1011
    %1190 = vmatpush1.bf16.msra.mxu0 %v1010
    %1191 = vmatprep.subr.bf16.mxu0 %v1014
    %1192 = vmatpush1.bf16.msra.mxu0 %v1013
    %1193 = vmatprep.subr.bf16.mxu0 %v1017
    %1194 = vmatpush1.bf16.msra.mxu0 %v1016
    %1195 = vmatprep.mubr.bf16.mxu0 %v475
    %1196 = vmatmul.mubr.bf16.gmra.mrb[0].mxu0 %v474
    %v1197 = vpop.f32.mrb[0].mxu0
    %v1198 = vadd.f32 %v639, %v1197
    %v1199 = vpop.f32.mrb[0].mxu0
    %v1200 = vadd.f32 %v643, %v1199
    %v1201 = vpop.f32.mrb[0].mxu0
    %v1202 = vadd.f32 %v639, %v1201
    %v1203 = vpop.f32.mrb[0].mxu0
    %v1204 = vadd.f32 %v643, %v1203
    %1205 = vmatprep.mubr.bf16.mxu0 %v479
    %1206 = vmatmul.mubr.bf16.gmra.mrb[0].mxu0 %v478
    %v1207 = vpop.f32.mrb[0].mxu0
    %v1208 = vadd.f32 %v639, %v1207
    %v1209 = vpop.f32.mrb[0].mxu0
    %v1210 = vadd.f32 %v643, %v1209
    %v1211 = vpop.f32.mrb[0].mxu0
    %v1212 = vadd.f32 %v639, %v1211
    %v1213 = vpop.f32.mrb[0].mxu0
    %v1214 = vadd.f32 %v643, %v1213
    %1215 = vmatprep.mubr.bf16.mxu0 %v483
    %1216 = vmatmul.mubr.bf16.gmra.mrb[0].mxu0 %v482
    %v1217 = vpop.f32.mrb[0].mxu0
    %v1218 = vadd.f32 %v639, %v1217
    %v1219 = vpop.f32.mrb[0].mxu0
    %v1220 = vadd.f32 %v643, %v1219
    %v1221 = vpop.f32.mrb[0].mxu0
    %v1222 = vadd.f32 %v639, %v1221
    %v1223 = vpop.f32.mrb[0].mxu0
    %v1224 = vadd.f32 %v643, %v1223
    %1225 = vmatprep.mubr.bf16.mxu0 %v487
    %1226 = vmatmul.mubr.bf16.gmra.mrb[0].mxu0 %v486
    %v1227 = vpop.f32.mrb[0].mxu0
    %v1228 = vadd.f32 %v639, %v1227
    %v1229 = vpop.f32.mrb[0].mxu0
    %v1230 = vadd.f32 %v643, %v1229
    %v1231 = vpop.f32.mrb[0].mxu0
    %v1232 = vadd.f32 %v639, %v1231
    %v1233 = vpop.f32.mrb[0].mxu0
    %v1234 = vadd.f32 %v643, %v1233
    %1235 = vmatprep.mubr.bf16.mxu0 %v491
    %1236 = vmatmul.mubr.bf16.gmra.mrb[0].mxu0 %v490
    %v1237 = vpop.f32.mrb[0].mxu0
    %v1238 = vadd.f32 %v639, %v1237
    %v1239 = vpop.f32.mrb[0].mxu0
    %v1240 = vadd.f32 %v643, %v1239
    %v1241 = vpop.f32.mrb[0].mxu0
    %v1242 = vadd.f32 %v639, %v1241
    %v1243 = vpop.f32.mrb[0].mxu0
    %v1244 = vadd.f32 %v643, %v1243
    %1245 = vmatprep.mubr.bf16.mxu0 %v495
    %1246 = vmatmul.mubr.bf16.gmra.mrb[0].mxu0 %v494
    %v1247 = vpop.f32.mrb[0].mxu0
    %v1248 = vadd.f32 %v639, %v1247
    %v1249 = vpop.f32.mrb[0].mxu0
    %v1250 = vadd.f32 %v643, %v1249
    %v1251 = vpop.f32.mrb[0].mxu0
    %v1252 = vadd.f32 %v639, %v1251
    %v1253 = vpop.f32.mrb[0].mxu0
    %v1254 = vadd.f32 %v643, %v1253
    %1255 = vmatprep.mubr.bf16.mxu0 %v499
    %1256 = vmatmul.mubr.bf16.gmra.mrb[0].mxu0 %v498
    %v1257 = vpop.f32.mrb[0].mxu0
    %v1258 = vadd.f32 %v639, %v1257
    %v1259 = vpop.f32.mrb[0].mxu0
    %v1260 = vadd.f32 %v643, %v1259
    %v1261 = vpop.f32.mrb[0].mxu0
    %v1262 = vadd.f32 %v639, %v1261
    %v1263 = vpop.f32.mrb[0].mxu0
    %v1264 = vadd.f32 %v643, %v1263
    %1265 = vmatprep.mubr.bf16.mxu0 %v503
    %1266 = vmatmul.mubr.bf16.gmra.mrb[0].mxu0 %v502
    %v1267 = vpop.f32.mrb[0].mxu0
    %v1268 = vadd.f32 %v639, %v1267
    %v1269 = vpop.f32.mrb[0].mxu0
    %v1270 = vadd.f32 %v643, %v1269
    %v1271 = vpop.f32.mrb[0].mxu0
    %v1272 = vadd.f32 %v639, %v1271
    %v1273 = vpop.f32.mrb[0].mxu0
    %v1274 = vadd.f32 %v643, %v1273
    %1275 = vdwg.mxu0
    %1276 = vmatprep.subr.bf16.mxu0 %v1020
    %1277 = vmatpush1.bf16.msra.mxu0 %v1019
    %1278 = vmatprep.subr.bf16.mxu0 %v1023
    %1279 = vmatpush1.bf16.msra.mxu0 %v1022
    %1280 = vmatprep.subr.bf16.mxu0 %v1026
    %1281 = vmatpush1.bf16.msra.mxu0 %v1025
    %1282 = vmatprep.subr.bf16.mxu0 %v1029
    %1283 = vmatpush1.bf16.msra.mxu0 %v1028
    %1284 = vmatprep.subr.bf16.mxu0 %v1032
    %1285 = vmatpush1.bf16.msra.mxu0 %v1031
    %1286 = vmatprep.subr.bf16.mxu0 %v1035
    %1287 = vmatpush1.bf16.msra.mxu0 %v1034
    %1288 = vmatprep.subr.bf16.mxu0 %v1038
    %1289 = vmatpush1.bf16.msra.mxu0 %v1037
    %1290 = vmatprep.subr.bf16.mxu0 %v1041
    %1291 = vmatpush1.bf16.msra.mxu0 %v1040
    %1292 = vmatprep.subr.bf16.mxu0 %v1044
    %1293 = vmatpush1.bf16.msra.mxu0 %v1043
    %1294 = vmatprep.subr.bf16.mxu0 %v1047
    %1295 = vmatpush1.bf16.msra.mxu0 %v1046
    %1296 = vmatprep.subr.bf16.mxu0 %v1050
    %1297 = vmatpush1.bf16.msra.mxu0 %v1049
    %1298 = vmatprep.subr.bf16.mxu0 %v1053
    %1299 = vmatpush1.bf16.msra.mxu0 %v1052
    %1300 = vmatprep.subr.bf16.mxu0 %v1056
    %1301 = vmatpush1.bf16.msra.mxu0 %v1055
    %1302 = vmatprep.subr.bf16.mxu0 %v1059
    %1303 = vmatpush1.bf16.msra.mxu0 %v1058
    %1304 = vmatprep.subr.bf16.mxu0 %v1062
    %1305 = vmatpush1.bf16.msra.mxu0 %v1061
    %1306 = vmatprep.subr.bf16.mxu0 %v1065
    %1307 = vmatpush1.bf16.msra.mxu0 %v1064
    %1308 = vmatprep.mubr.bf16.mxu0 %v477
    %1309 = vmatmul.mubr.bf16.gmra.mrb[0].mxu0 %v476
    %v1310 = vpop.f32.mrb[0].mxu0
    %v1311 = vadd.f32 %v1198, %v1310
    %v1312 = vpop.f32.mrb[0].mxu0
    %v1313 = vadd.f32 %v1200, %v1312
    %v1314 = vpop.f32.mrb[0].mxu0
    %v1315 = vadd.f32 %v1202, %v1314
    %v1316 = vpop.f32.mrb[0].mxu0
    %v1317 = vadd.f32 %v1204, %v1316
    %1318 = vmatprep.mubr.bf16.mxu0 %v481
    %1319 = vmatmul.mubr.bf16.gmra.mrb[0].mxu0 %v480
    %v1320 = vpop.f32.mrb[0].mxu0
    %v1321 = vadd.f32 %v1208, %v1320
    %v1322 = vpop.f32.mrb[0].mxu0
    %v1323 = vadd.f32 %v1210, %v1322
    %v1324 = vpop.f32.mrb[0].mxu0
    %v1325 = vadd.f32 %v1212, %v1324
    %v1326 = vpop.f32.mrb[0].mxu0
    %v1327 = vadd.f32 %v1214, %v1326
    %1328 = vmatprep.mubr.bf16.mxu0 %v485
    %1329 = vmatmul.mubr.bf16.gmra.mrb[0].mxu0 %v484
    %v1330 = vpop.f32.mrb[0].mxu0
    %v1331 = vadd.f32 %v1218, %v1330
    %v1332 = vpop.f32.mrb[0].mxu0
    %v1333 = vadd.f32 %v1220, %v1332
    %v1334 = vpop.f32.mrb[0].mxu0
    %v1335 = vadd.f32 %v1222, %v1334
    %v1336 = vpop.f32.mrb[0].mxu0
    %v1337 = vadd.f32 %v1224, %v1336
    %1338 = vmatprep.mubr.bf16.mxu0 %v489
    %1339 = vmatmul.mubr.bf16.gmra.mrb[0].mxu0 %v488
    %v1340 = vpop.f32.mrb[0].mxu0
    %v1341 = vadd.f32 %v1228, %v1340
    %v1342 = vpop.f32.mrb[0].mxu0
    %v1343 = vadd.f32 %v1230, %v1342
    %v1344 = vpop.f32.mrb[0].mxu0
    %v1345 = vadd.f32 %v1232, %v1344
    %v1346 = vpop.f32.mrb[0].mxu0
    %v1347 = vadd.f32 %v1234, %v1346
    %1348 = vmatprep.mubr.bf16.mxu0 %v493
    %1349 = vmatmul.mubr.bf16.gmra.mrb[0].mxu0 %v492
    %v1350 = vpop.f32.mrb[0].mxu0
    %v1351 = vadd.f32 %v1238, %v1350
    %v1352 = vpop.f32.mrb[0].mxu0
    %v1353 = vadd.f32 %v1240, %v1352
    %v1354 = vpop.f32.mrb[0].mxu0
    %v1355 = vadd.f32 %v1242, %v1354
    %v1356 = vpop.f32.mrb[0].mxu0
    %v1357 = vadd.f32 %v1244, %v1356
    %1358 = vmatprep.mubr.bf16.mxu0 %v497
    %1359 = vmatmul.mubr.bf16.gmra.mrb[0].mxu0 %v496
    %v1360 = vpop.f32.mrb[0].mxu0
    %v1361 = vadd.f32 %v1248, %v1360
    %v1362 = vpop.f32.mrb[0].mxu0
    %v1363 = vadd.f32 %v1250, %v1362
    %v1364 = vpop.f32.mrb[0].mxu0
    %v1365 = vadd.f32 %v1252, %v1364
    %v1366 = vpop.f32.mrb[0].mxu0
    %v1367 = vadd.f32 %v1254, %v1366
    %1368 = vmatprep.mubr.bf16.mxu0 %v501
    %1369 = vmatmul.mubr.bf16.gmra.mrb[0].mxu0 %v500
    %v1370 = vpop.f32.mrb[0].mxu0
    %v1371 = vadd.f32 %v1258, %v1370
    %v1372 = vpop.f32.mrb[0].mxu0
    %v1373 = vadd.f32 %v1260, %v1372
    %v1374 = vpop.f32.mrb[0].mxu0
    %v1375 = vadd.f32 %v1262, %v1374
    %v1376 = vpop.f32.mrb[0].mxu0
    %v1377 = vadd.f32 %v1264, %v1376
    %1378 = vmatprep.mubr.bf16.mxu0 %v505
    %1379 = vmatmul.mubr.bf16.gmra.mrb[0].mxu0 %v504
    %v1380 = vpop.f32.mrb[0].mxu0
    %v1381 = vadd.f32 %v1268, %v1380
    %v1382 = vpop.f32.mrb[0].mxu0
    %v1383 = vadd.f32 %v1270, %v1382
    %v1384 = vpop.f32.mrb[0].mxu0
    %v1385 = vadd.f32 %v1272, %v1384
    %v1386 = vpop.f32.mrb[0].mxu0
    %v1387 = vadd.f32 %v1274, %v1386
    %1388 = vdwg.mxu0
    %1389 = vmatprep.subr.bf16.mxu0 0
    %1390 = vmatpush1.bf16.msra.mxu0 %v973
    %1391 = vmatprep.subr.bf16.mxu0 0
    %1392 = vmatpush1.bf16.msra.mxu0 %v976
    %1393 = vmatprep.subr.bf16.mxu0 0
    %1394 = vmatpush1.bf16.msra.mxu0 %v979
    %1395 = vmatprep.subr.bf16.mxu0 0
    %1396 = vmatpush1.bf16.msra.mxu0 %v982
    %1397 = vmatprep.subr.bf16.mxu0 0
    %1398 = vmatpush1.bf16.msra.mxu0 %v985
    %1399 = vmatprep.subr.bf16.mxu0 0
    %1400 = vmatpush1.bf16.msra.mxu0 %v988
    %1401 = vmatprep.subr.bf16.mxu0 0
    %1402 = vmatpush1.bf16.msra.mxu0 %v991
    %1403 = vmatprep.subr.bf16.mxu0 0
    %1404 = vmatpush1.bf16.msra.mxu0 %v994
    %1405 = vmatprep.subr.bf16.mxu0 0
    %1406 = vmatpush1.bf16.msra.mxu0 %v997
    %1407 = vmatprep.subr.bf16.mxu0 0
    %1408 = vmatpush1.bf16.msra.mxu0 %v1000
    %1409 = vmatprep.subr.bf16.mxu0 0
    %1410 = vmatpush1.bf16.msra.mxu0 %v1003
    %1411 = vmatprep.subr.bf16.mxu0 0
    %1412 = vmatpush1.bf16.msra.mxu0 %v1006
    %1413 = vmatprep.subr.bf16.mxu0 0
    %1414 = vmatpush1.bf16.msra.mxu0 %v1009
    %1415 = vmatprep.subr.bf16.mxu0 0
    %1416 = vmatpush1.bf16.msra.mxu0 %v1012
    %1417 = vmatprep.subr.bf16.mxu0 0
    %1418 = vmatpush1.bf16.msra.mxu0 %v1015
    %1419 = vmatprep.subr.bf16.mxu0 0
    %1420 = vmatpush1.bf16.msra.mxu0 %v1018
    %1421 = vmatprep.mubr.bf16.mxu0 %v475
    %1422 = vmatmul.mubr.bf16.gmra.mrb[0].mxu0 %v474
    %v1423 = vpop.f32.mrb[0].mxu0
    %v1424 = vadd.f32 %v647, %v1423
    %v1425 = vpop.f32.mrb[0].mxu0
    %v1426 = vpop.f32.mrb[0].mxu0
    %v1427 = vadd.f32 %v647, %v1426
    %v1428 = vpop.f32.mrb[0].mxu0
    %1429 = vmatprep.mubr.bf16.mxu0 %v479
    %1430 = vmatmul.mubr.bf16.gmra.mrb[0].mxu0 %v478
    %v1431 = vpop.f32.mrb[0].mxu0
    %v1432 = vadd.f32 %v647, %v1431
    %v1433 = vpop.f32.mrb[0].mxu0
    %v1434 = vpop.f32.mrb[0].mxu0
    %v1435 = vadd.f32 %v647, %v1434
    %v1436 = vpop.f32.mrb[0].mxu0
    %1437 = vmatprep.mubr.bf16.mxu0 %v483
    %1438 = vmatmul.mubr.bf16.gmra.mrb[0].mxu0 %v482
    %v1439 = vpop.f32.mrb[0].mxu0
    %v1440 = vadd.f32 %v647, %v1439
    %v1441 = vpop.f32.mrb[0].mxu0
    %v1442 = vpop.f32.mrb[0].mxu0
    %v1443 = vadd.f32 %v647, %v1442
    %v1444 = vpop.f32.mrb[0].mxu0
    %1445 = vmatprep.mubr.bf16.mxu0 %v487
    %1446 = vmatmul.mubr.bf16.gmra.mrb[0].mxu0 %v486
    %v1447 = vpop.f32.mrb[0].mxu0
    %v1448 = vadd.f32 %v647, %v1447
    %v1449 = vpop.f32.mrb[0].mxu0
    %v1450 = vpop.f32.mrb[0].mxu0
    %v1451 = vadd.f32 %v647, %v1450
    %v1452 = vpop.f32.mrb[0].mxu0
    %1453 = vmatprep.mubr.bf16.mxu0 %v491
    %1454 = vmatmul.mubr.bf16.gmra.mrb[0].mxu0 %v490
    %v1455 = vpop.f32.mrb[0].mxu0
    %v1456 = vadd.f32 %v647, %v1455
    %v1457 = vpop.f32.mrb[0].mxu0
    %v1458 = vpop.f32.mrb[0].mxu0
    %v1459 = vadd.f32 %v647, %v1458
    %v1460 = vpop.f32.mrb[0].mxu0
    %1461 = vmatprep.mubr.bf16.mxu0 %v495
    %1462 = vmatmul.mubr.bf16.gmra.mrb[0].mxu0 %v494
    %v1463 = vpop.f32.mrb[0].mxu0
    %v1464 = vadd.f32 %v647, %v1463
    %v1465 = vpop.f32.mrb[0].mxu0
    %v1466 = vpop.f32.mrb[0].mxu0
    %v1467 = vadd.f32 %v647, %v1466
    %v1468 = vpop.f32.mrb[0].mxu0
    %1469 = vmatprep.mubr.bf16.mxu0 %v499
    %1470 = vmatmul.mubr.bf16.gmra.mrb[0].mxu0 %v498
    %v1471 = vpop.f32.mrb[0].mxu0
    %v1472 = vadd.f32 %v647, %v1471
    %v1473 = vpop.f32.mrb[0].mxu0
    %v1474 = vpop.f32.mrb[0].mxu0
    %v1475 = vadd.f32 %v647, %v1474
    %v1476 = vpop.f32.mrb[0].mxu0
    %1477 = vmatprep.mubr.bf16.mxu0 %v503
    %1478 = vmatmul.mubr.bf16.gmra.mrb[0].mxu0 %v502
    %v1479 = vpop.f32.mrb[0].mxu0
    %v1480 = vadd.f32 %v647, %v1479
    %v1481 = vpop.f32.mrb[0].mxu0
    %v1482 = vpop.f32.mrb[0].mxu0
    %v1483 = vadd.f32 %v647, %v1482
    %v1484 = vpop.f32.mrb[0].mxu0
    %1485 = vdwg.mxu0
    %1486 = vmatprep.subr.bf16.mxu0 0
    %1487 = vmatpush1.bf16.msra.mxu0 %v1021
    %1488 = vmatprep.subr.bf16.mxu0 0
    %1489 = vmatpush1.bf16.msra.mxu0 %v1024
    %1490 = vmatprep.subr.bf16.mxu0 0
    %1491 = vmatpush1.bf16.msra.mxu0 %v1027
    %1492 = vmatprep.subr.bf16.mxu0 0
    %1493 = vmatpush1.bf16.msra.mxu0 %v1030
    %1494 = vmatprep.subr.bf16.mxu0 0
    %1495 = vmatpush1.bf16.msra.mxu0 %v1033
    %1496 = vmatprep.subr.bf16.mxu0 0
    %1497 = vmatpush1.bf16.msra.mxu0 %v1036
    %1498 = vmatprep.subr.bf16.mxu0 0
    %1499 = vmatpush1.bf16.msra.mxu0 %v1039
    %1500 = vmatprep.subr.bf16.mxu0 0
    %1501 = vmatpush1.bf16.msra.mxu0 %v1042
    %1502 = vmatprep.subr.bf16.mxu0 0
    %1503 = vmatpush1.bf16.msra.mxu0 %v1045
    %1504 = vmatprep.subr.bf16.mxu0 0
    %1505 = vmatpush1.bf16.msra.mxu0 %v1048
    %1506 = vmatprep.subr.bf16.mxu0 0
    %1507 = vmatpush1.bf16.msra.mxu0 %v1051
    %1508 = vmatprep.subr.bf16.mxu0 0
    %1509 = vmatpush1.bf16.msra.mxu0 %v1054
    %1510 = vmatprep.subr.bf16.mxu0 0
    %1511 = vmatpush1.bf16.msra.mxu0 %v1057
    %1512 = vmatprep.subr.bf16.mxu0 0
    %1513 = vmatpush1.bf16.msra.mxu0 %v1060
    %1514 = vmatprep.subr.bf16.mxu0 0
    %1515 = vmatpush1.bf16.msra.mxu0 %v1063
    %1516 = vmatprep.subr.bf16.mxu0 0
    %1517 = vmatpush1.bf16.msra.mxu0 %v1066
    %1518 = vmatprep.mubr.bf16.mxu0 %v477
    %1519 = vmatmul.mubr.bf16.gmra.mrb[0].mxu0 %v476
    %v1520 = vpop.f32.mrb[0].mxu0
    %v1521 = vadd.f32 %v1424, %v1520
    %v1522 = vpop.f32.mrb[0].mxu0
    %v1523 = vpop.f32.mrb[0].mxu0
    %v1524 = vadd.f32 %v1427, %v1523
    %v1525 = vpop.f32.mrb[0].mxu0
    %1526 = vmatprep.mubr.bf16.mxu0 %v481
    %1527 = vmatmul.mubr.bf16.gmra.mrb[0].mxu0 %v480
    %v1528 = vpop.f32.mrb[0].mxu0
    %v1529 = vadd.f32 %v1432, %v1528
    %v1530 = vpop.f32.mrb[0].mxu0
    %v1531 = vpop.f32.mrb[0].mxu0
    %v1532 = vadd.f32 %v1435, %v1531
    %v1533 = vpop.f32.mrb[0].mxu0
    %1534 = vmatprep.mubr.bf16.mxu0 %v485
    %1535 = vmatmul.mubr.bf16.gmra.mrb[0].mxu0 %v484
    %v1536 = vpop.f32.mrb[0].mxu0
    %v1537 = vadd.f32 %v1440, %v1536
    %v1538 = vpop.f32.mrb[0].mxu0
    %v1539 = vpop.f32.mrb[0].mxu0
    %v1540 = vadd.f32 %v1443, %v1539
    %v1541 = vpop.f32.mrb[0].mxu0
    %1542 = vmatprep.mubr.bf16.mxu0 %v489
    %1543 = vmatmul.mubr.bf16.gmra.mrb[0].mxu0 %v488
    %v1544 = vpop.f32.mrb[0].mxu0
    %v1545 = vadd.f32 %v1448, %v1544
    %v1546 = vpop.f32.mrb[0].mxu0
    %v1547 = vpop.f32.mrb[0].mxu0
    %v1548 = vadd.f32 %v1451, %v1547
    %v1549 = vpop.f32.mrb[0].mxu0
    %1550 = vmatprep.mubr.bf16.mxu0 %v493
    %1551 = vmatmul.mubr.bf16.gmra.mrb[0].mxu0 %v492
    %v1552 = vpop.f32.mrb[0].mxu0
    %v1553 = vadd.f32 %v1456, %v1552
    %v1554 = vpop.f32.mrb[0].mxu0
    %v1555 = vpop.f32.mrb[0].mxu0
    %v1556 = vadd.f32 %v1459, %v1555
    %v1557 = vpop.f32.mrb[0].mxu0
    %1558 = vmatprep.mubr.bf16.mxu0 %v497
    %1559 = vmatmul.mubr.bf16.gmra.mrb[0].mxu0 %v496
    %v1560 = vpop.f32.mrb[0].mxu0
    %v1561 = vadd.f32 %v1464, %v1560
    %v1562 = vpop.f32.mrb[0].mxu0
    %v1563 = vpop.f32.mrb[0].mxu0
    %v1564 = vadd.f32 %v1467, %v1563
    %v1565 = vpop.f32.mrb[0].mxu0
    %1566 = vmatprep.mubr.bf16.mxu0 %v501
    %1567 = vmatmul.mubr.bf16.gmra.mrb[0].mxu0 %v500
    %v1568 = vpop.f32.mrb[0].mxu0
    %v1569 = vadd.f32 %v1472, %v1568
    %v1570 = vpop.f32.mrb[0].mxu0
    %v1571 = vpop.f32.mrb[0].mxu0
    %v1572 = vadd.f32 %v1475, %v1571
    %v1573 = vpop.f32.mrb[0].mxu0
    %1574 = vmatprep.mubr.bf16.mxu0 %v505
    %1575 = vmatmul.mubr.bf16.gmra.mrb[0].mxu0 %v504
    %v1576 = vpop.f32.mrb[0].mxu0
    %v1577 = vadd.f32 %v1480, %v1576
    %v1578 = vpop.f32.mrb[0].mxu0
    %v1579 = vpop.f32.mrb[0].mxu0
    %v1580 = vadd.f32 %v1483, %v1579
    %v1581 = vpop.f32.mrb[0].mxu0
    %1582 = vdwg.mxu0
    %v1583 = vmax.f32 %v1311, 0.0
    %v1584 = vmax.f32 %v1313, 0.0
    %v1585 = vmax.f32 %v1521, 0.0
    %v1586 = vmax.f32 %v1315, 0.0
    %v1587 = vmax.f32 %v1317, 0.0
    %v1588 = vmax.f32 %v1524, 0.0
    %v1589 = vmax.f32 %v1321, 0.0
    %v1590 = vmax.f32 %v1323, 0.0
    %v1591 = vmax.f32 %v1529, 0.0
    %v1592 = vmax.f32 %v1325, 0.0
    %v1593 = vmax.f32 %v1327, 0.0
    %v1594 = vmax.f32 %v1532, 0.0
    %v1595 = vmax.f32 %v1331, 0.0
    %v1596 = vmax.f32 %v1333, 0.0
    %v1597 = vmax.f32 %v1537, 0.0
    %v1598 = vmax.f32 %v1335, 0.0
    %v1599 = vmax.f32 %v1337, 0.0
    %v1600 = vmax.f32 %v1540, 0.0
    %v1601 = vmax.f32 %v1341, 0.0
    %v1602 = vmax.f32 %v1343, 0.0
    %v1603 = vmax.f32 %v1545, 0.0
    %v1604 = vmax.f32 %v1345, 0.0
    %v1605 = vmax.f32 %v1347, 0.0
    %v1606 = vmax.f32 %v1548, 0.0
    %v1607 = vmax.f32 %v1351, 0.0
    %v1608 = vmax.f32 %v1353, 0.0
    %v1609 = vmax.f32 %v1553, 0.0
    %v1610 = vmax.f32 %v1355, 0.0
    %v1611 = vmax.f32 %v1357, 0.0
    %v1612 = vmax.f32 %v1556, 0.0
    %v1613 = vmax.f32 %v1361, 0.0
    %v1614 = vmax.f32 %v1363, 0.0
    %v1615 = vmax.f32 %v1561, 0.0
    %v1616 = vmax.f32 %v1365, 0.0
    %v1617 = vmax.f32 %v1367, 0.0
    %v1618 = vmax.f32 %v1564, 0.0
    %v1619 = vmax.f32 %v1371, 0.0
    %v1620 = vmax.f32 %v1373, 0.0
    %v1621 = vmax.f32 %v1569, 0.0
    %v1622 = vmax.f32 %v1375, 0.0
    %v1623 = vmax.f32 %v1377, 0.0
    %v1624 = vmax.f32 %v1572, 0.0
    %v1625 = vmax.f32 %v1381, 0.0
    %v1626 = vmax.f32 %v1383, 0.0
    %v1627 = vmax.f32 %v1577, 0.0
    %v1628 = vmax.f32 %v1385, 0.0
    %v1629 = vmax.f32 %v1387, 0.0
    %v1630 = vmax.f32 %v1580, 0.0
    %v1631 = vpack.c.bf16 %v1586, %v1583
    %v1632 = vpack.c.bf16 %v1587, %v1584
    %v1633 = vpack.c.bf16 %v1588, %v1585
    %v1634 = vpack.c.bf16 %v1592, %v1589
    %v1635 = vpack.c.bf16 %v1593, %v1590
    %v1636 = vpack.c.bf16 %v1594, %v1591
    %v1637 = vpack.c.bf16 %v1598, %v1595
    %v1638 = vpack.c.bf16 %v1599, %v1596
    %v1639 = vpack.c.bf16 %v1600, %v1597
    %v1640 = vpack.c.bf16 %v1604, %v1601
    %v1641 = vpack.c.bf16 %v1605, %v1602
    %v1642 = vpack.c.bf16 %v1606, %v1603
    %v1643 = vpack.c.bf16 %v1610, %v1607
    %v1644 = vpack.c.bf16 %v1611, %v1608
    %v1645 = vpack.c.bf16 %v1612, %v1609
    %v1646 = vpack.c.bf16 %v1616, %v1613
    %v1647 = vpack.c.bf16 %v1617, %v1614
    %v1648 = vpack.c.bf16 %v1618, %v1615
    %v1649 = vpack.c.bf16 %v1622, %v1619
    %v1650 = vpack.c.bf16 %v1623, %v1620
    %v1651 = vpack.c.bf16 %v1624, %v1621
    %v1652 = vpack.c.bf16 %v1628, %v1625
    %v1653 = vpack.c.bf16 %v1629, %v1626
    %v1654 = vpack.c.bf16 %v1630, %v1627
    %v1655 = vld [vmem:[#allocation5] sm:$0xf]
    %v1656 = vld [vmem:[#allocation5 + $0x4] sm:$0xf]
    %v1657 = vld [vmem:[#allocation5 + $0x8] sm:$0xf]
    %v1658 = vld [vmem:[#allocation5 + $0xc] sm:$0xf]
    %v1659 = vld [vmem:[#allocation5 + $0x10] sm:$0xf]
    %v1660 = vld [vmem:[#allocation5 + $0x14] sm:$0xf]
    %v1661 = vld [vmem:[#allocation5 + $0x18] sm:$0xf]
    %v1662 = vld [vmem:[#allocation5 + $0x1c] sm:$0xf]
    %v1663 = vld [vmem:[#allocation5 + $0x20] sm:$0xf]
    %v1664 = vld [vmem:[#allocation5 + $0x24] sm:$0xf]
    %v1665 = vld [vmem:[#allocation5 + $0x28] sm:$0xf]
    %v1666 = vld [vmem:[#allocation5 + $0x2c] sm:$0xf]
    %v1667 = vld [vmem:[#allocation5 + $0x30] sm:$0xf]
    %v1668 = vld [vmem:[#allocation5 + $0x34] sm:$0xf]
    %v1669 = vld [vmem:[#allocation5 + $0x38] sm:$0xf]
    %v1670 = vld [vmem:[#allocation5 + $0x3c] sm:$0xf]
    %v1671 = vld [vmem:[#allocation5 + $0x40] sm:$0xf]
    %v1672 = vld [vmem:[#allocation5 + $0x44] sm:$0xf]
    %v1673 = vld [vmem:[#allocation5 + $0x48] sm:$0xf]
    %v1674 = vld [vmem:[#allocation5 + $0x4c] sm:$0xf]
    %v1675 = vld [vmem:[#allocation5 + $0x50] sm:$0xf]
    %v1676 = vld [vmem:[#allocation5 + $0x54] sm:$0xf]
    %v1677 = vld [vmem:[#allocation5 + $0x58] sm:$0xf]
    %v1678 = vld [vmem:[#allocation5 + $0x5c] sm:$0xf]
    %v1679 = vld [vmem:[#allocation5 + $0x60] sm:$0xf]
    %v1680 = vld [vmem:[#allocation5 + $0x64] sm:$0xf]
    %v1681 = vld [vmem:[#allocation5 + $0x68] sm:$0xf]
    %v1682 = vld [vmem:[#allocation5 + $0x6c] sm:$0xf]
    %v1683 = vld [vmem:[#allocation5 + $0x70] sm:$0xf]
    %v1684 = vld [vmem:[#allocation5 + $0x74] sm:$0xf]
    %v1685 = vld [vmem:[#allocation5 + $0x78] sm:$0xf]
    %v1686 = vld [vmem:[#allocation5 + $0x7c] sm:$0xf]
    %v1687 = vld [vmem:[#allocation5 + $0x80] sm:$0xf]
    %v1688 = vld [vmem:[#allocation5 + $0x84] sm:$0xf]
    %v1689 = vld [vmem:[#allocation5 + $0x88] sm:$0xf]
    %v1690 = vld [vmem:[#allocation5 + $0x8c] sm:$0xf]
    %v1691 = vld [vmem:[#allocation5 + $0x90] sm:$0xf]
    %v1692 = vld [vmem:[#allocation5 + $0x94] sm:$0xf]
    %v1693 = vld [vmem:[#allocation5 + $0x98] sm:$0xf]
    %v1694 = vld [vmem:[#allocation5 + $0x9c] sm:$0xf]
    %v1695 = vld [vmem:[#allocation5 + $0xa0] sm:$0xf]
    %v1696 = vld [vmem:[#allocation5 + $0xa4] sm:$0xf]
    %v1697 = vld [vmem:[#allocation5 + $0xa8] sm:$0xf]
    %v1698 = vld [vmem:[#allocation5 + $0xac] sm:$0xf]
    %v1699 = vld [vmem:[#allocation5 + $0xb0] sm:$0xf]
    %v1700 = vld [vmem:[#allocation5 + $0xb4] sm:$0xf]
    %v1701 = vld [vmem:[#allocation5 + $0xb8] sm:$0xf]
    %v1702 = vld [vmem:[#allocation5 + $0xbc] sm:$0xf]
    %v1703 = vld [vmem:[%s6] sm:$0x1]
    %v1705 = vlaneseq
    %v1706 = vshrl.u32 %v1705, 7
    %v1707 = vsub.s32 0, %v1706
    %v1708 = vrot.slane %v1703, %v1707
    %v1758 = vunpack.c.l.b16 %v1655
    %v1759 = vunpack.c.l.b16 %v1656
    %v1760 = vunpack.c.l.b16 %v1657
    %v1761 = vunpack.c.l.b16 %v1658
    %v1762 = vunpack.c.l.b16 %v1659
    %v1763 = vunpack.c.l.b16 %v1660
    %v1764 = vunpack.c.l.b16 %v1661
    %v1765 = vunpack.c.l.b16 %v1662
    %v1766 = vunpack.c.l.b16 %v1663
    %v1767 = vunpack.c.l.b16 %v1664
    %v1768 = vunpack.c.l.b16 %v1665
    %v1769 = vunpack.c.l.b16 %v1666
    %v1770 = vunpack.c.l.b16 %v1667
    %v1771 = vunpack.c.l.b16 %v1668
    %v1772 = vunpack.c.l.b16 %v1669
    %v1773 = vunpack.c.l.b16 %v1670
    %v1774 = vunpack.c.l.b16 %v1671
    %v1775 = vunpack.c.l.b16 %v1672
    %v1776 = vunpack.c.l.b16 %v1673
    %v1777 = vunpack.c.l.b16 %v1674
    %v1778 = vunpack.c.l.b16 %v1675
    %v1779 = vunpack.c.l.b16 %v1676
    %v1780 = vunpack.c.l.b16 %v1677
    %v1781 = vunpack.c.l.b16 %v1678
    %v1782 = vunpack.c.l.b16 %v1679
    %v1783 = vunpack.c.l.b16 %v1680
    %v1784 = vunpack.c.l.b16 %v1681
    %v1785 = vunpack.c.l.b16 %v1682
    %v1786 = vunpack.c.l.b16 %v1683
    %v1787 = vunpack.c.l.b16 %v1684
    %v1788 = vunpack.c.l.b16 %v1685
    %v1789 = vunpack.c.l.b16 %v1686
    %v1790 = vunpack.c.l.b16 %v1687
    %v1791 = vunpack.c.l.b16 %v1688
    %v1792 = vunpack.c.l.b16 %v1689
    %v1793 = vunpack.c.l.b16 %v1690
    %v1794 = vunpack.c.l.b16 %v1691
    %v1795 = vunpack.c.l.b16 %v1692
    %v1796 = vunpack.c.l.b16 %v1693
    %v1797 = vunpack.c.l.b16 %v1694
    %v1798 = vunpack.c.l.b16 %v1695
    %v1799 = vunpack.c.l.b16 %v1696
    %v1800 = vunpack.c.l.b16 %v1697
    %v1801 = vunpack.c.l.b16 %v1698
    %v1802 = vunpack.c.l.b16 %v1699
    %v1803 = vunpack.c.l.b16 %v1700
    %v1804 = vunpack.c.l.b16 %v1701
    %v1805 = vunpack.c.l.b16 %v1702
    %v1806 = vpack.c.b16 %v1759, %v1758
    %v1807 = vpack.c.b16 %v1761, %v1760
    %v1808 = vpack.c.b16 %v1763, %v1762
    %v1809 = vpack.c.b16 %v1765, %v1764
    %v1810 = vpack.c.b16 %v1767, %v1766
    %v1811 = vpack.c.b16 %v1769, %v1768
    %v1812 = vpack.c.b16 %v1771, %v1770
    %v1813 = vpack.c.b16 %v1773, %v1772
    %v1814 = vpack.c.b16 %v1775, %v1774
    %v1815 = vpack.c.b16 %v1777, %v1776
    %v1816 = vpack.c.b16 %v1779, %v1778
    %v1817 = vpack.c.b16 %v1781, %v1780
    %v1818 = vpack.c.b16 %v1783, %v1782
    %v1819 = vpack.c.b16 %v1785, %v1784
    %v1820 = vpack.c.b16 %v1787, %v1786
    %v1821 = vpack.c.b16 %v1789, %v1788
    %v1822 = vpack.c.b16 %v1791, %v1790
    %v1823 = vpack.c.b16 %v1793, %v1792
    %v1824 = vpack.c.b16 %v1795, %v1794
    %v1825 = vpack.c.b16 %v1797, %v1796
    %v1826 = vpack.c.b16 %v1799, %v1798
    %v1827 = vpack.c.b16 %v1801, %v1800
    %v1828 = vpack.c.b16 %v1803, %v1802
    %v1829 = vpack.c.b16 %v1805, %v1804
    %1854 = vmatprep.subr.bf16.mxu0 0
    %1855 = vmatpush1.bf16.msra.mxu0 %v1806
    %1856 = vmatprep.subr.bf16.mxu0 0
    %1857 = vmatpush1.bf16.msra.mxu0 %v1807
    %1858 = vmatprep.subr.bf16.mxu0 0
    %1859 = vmatpush1.bf16.msra.mxu0 %v1808
    %1860 = vmatprep.subr.bf16.mxu0 0
    %1861 = vmatpush1.bf16.msra.mxu0 %v1809
    %1862 = vmatprep.subr.bf16.mxu0 0
    %1863 = vmatpush1.bf16.msra.mxu0 %v1810
    %1864 = vmatprep.subr.bf16.mxu0 0
    %1865 = vmatpush1.bf16.msra.mxu0 %v1811
    %1866 = vmatprep.subr.bf16.mxu0 0
    %1867 = vmatpush1.bf16.msra.mxu0 %v1812
    %1868 = vmatprep.subr.bf16.mxu0 0
    %1869 = vmatpush1.bf16.msra.mxu0 %v1813
    %1870 = vmatprep.subr.bf16.mxu0 0
    %1871 = vmatpush1.bf16.msra.mxu0 %v1814
    %1872 = vmatprep.subr.bf16.mxu0 0
    %1873 = vmatpush1.bf16.msra.mxu0 %v1815
    %1874 = vmatprep.subr.bf16.mxu0 0
    %1875 = vmatpush1.bf16.msra.mxu0 %v1816
    %1876 = vmatprep.subr.bf16.mxu0 0
    %1877 = vmatpush1.bf16.msra.mxu0 %v1817
    %1878 = vmatprep.subr.bf16.mxu0 0
    %1879 = vmatpush1.bf16.msra.mxu0 %v1818
    %1880 = vmatprep.subr.bf16.mxu0 0
    %1881 = vmatpush1.bf16.msra.mxu0 %v1819
    %1882 = vmatprep.subr.bf16.mxu0 0
    %1883 = vmatpush1.bf16.msra.mxu0 %v1820
    %1884 = vmatprep.subr.bf16.mxu0 0
    %1885 = vmatpush1.bf16.msra.mxu0 %v1821
    %1886 = vmatprep.mubr.bf16.mxu0 %v1632
    %1887 = vmatmul.mubr.bf16.gmra.mrb[0].mxu0 %v1631
    %v1888 = vpop.f32.mrb[0].mxu0
    %v1889 = vadd.f32 %v1708, %v1888
    %v1890 = vpop.f32.mrb[0].mxu0
    %v1891 = vpop.f32.mrb[0].mxu0
    %v1892 = vadd.f32 %v1708, %v1891
    %v1893 = vpop.f32.mrb[0].mxu0
    %1894 = vmatprep.mubr.bf16.mxu0 %v1635
    %1895 = vmatmul.mubr.bf16.gmra.mrb[0].mxu0 %v1634
    %v1896 = vpop.f32.mrb[0].mxu0
    %v1897 = vadd.f32 %v1708, %v1896
    %v1898 = vpop.f32.mrb[0].mxu0
    %v1899 = vpop.f32.mrb[0].mxu0
    %v1900 = vadd.f32 %v1708, %v1899
    %v1901 = vpop.f32.mrb[0].mxu0
    %1902 = vmatprep.mubr.bf16.mxu0 %v1638
    %1903 = vmatmul.mubr.bf16.gmra.mrb[0].mxu0 %v1637
    %v1904 = vpop.f32.mrb[0].mxu0
    %v1905 = vadd.f32 %v1708, %v1904
    %v1906 = vpop.f32.mrb[0].mxu0
    %v1907 = vpop.f32.mrb[0].mxu0
    %v1908 = vadd.f32 %v1708, %v1907
    %v1909 = vpop.f32.mrb[0].mxu0
    %1910 = vmatprep.mubr.bf16.mxu0 %v1641
    %1911 = vmatmul.mubr.bf16.gmra.mrb[0].mxu0 %v1640
    %v1912 = vpop.f32.mrb[0].mxu0
    %v1913 = vadd.f32 %v1708, %v1912
    %v1914 = vpop.f32.mrb[0].mxu0
    %v1915 = vpop.f32.mrb[0].mxu0
    %v1916 = vadd.f32 %v1708, %v1915
    %v1917 = vpop.f32.mrb[0].mxu0
    %1918 = vmatprep.mubr.bf16.mxu0 %v1644
    %1919 = vmatmul.mubr.bf16.gmra.mrb[0].mxu0 %v1643
    %v1920 = vpop.f32.mrb[0].mxu0
    %v1921 = vadd.f32 %v1708, %v1920
    %v1922 = vpop.f32.mrb[0].mxu0
    %v1923 = vpop.f32.mrb[0].mxu0
    %v1924 = vadd.f32 %v1708, %v1923
    %v1925 = vpop.f32.mrb[0].mxu0
    %1926 = vmatprep.mubr.bf16.mxu0 %v1647
    %1927 = vmatmul.mubr.bf16.gmra.mrb[0].mxu0 %v1646
    %v1928 = vpop.f32.mrb[0].mxu0
    %v1929 = vadd.f32 %v1708, %v1928
    %v1930 = vpop.f32.mrb[0].mxu0
    %v1931 = vpop.f32.mrb[0].mxu0
    %v1932 = vadd.f32 %v1708, %v1931
    %v1933 = vpop.f32.mrb[0].mxu0
    %1934 = vmatprep.mubr.bf16.mxu0 %v1650
    %1935 = vmatmul.mubr.bf16.gmra.mrb[0].mxu0 %v1649
    %v1936 = vpop.f32.mrb[0].mxu0
    %v1937 = vadd.f32 %v1708, %v1936
    %v1938 = vpop.f32.mrb[0].mxu0
    %v1939 = vpop.f32.mrb[0].mxu0
    %v1940 = vadd.f32 %v1708, %v1939
    %v1941 = vpop.f32.mrb[0].mxu0
    %1942 = vmatprep.mubr.bf16.mxu0 %v1653
    %1943 = vmatmul.mubr.bf16.gmra.mrb[0].mxu0 %v1652
    %v1944 = vpop.f32.mrb[0].mxu0
    %v1945 = vadd.f32 %v1708, %v1944
    %v1946 = vpop.f32.mrb[0].mxu0
    %v1947 = vpop.f32.mrb[0].mxu0
    %v1948 = vadd.f32 %v1708, %v1947
    %v1949 = vpop.f32.mrb[0].mxu0
    %1950 = vdwg.mxu0
    %1951 = vmatprep.subr.bf16.mxu0 0
    %1952 = vmatpush1.bf16.msra.mxu0 %v1822
    %1953 = vmatprep.subr.bf16.mxu0 0
    %1954 = vmatpush1.bf16.msra.mxu0 %v1823
    %1955 = vmatprep.subr.bf16.mxu0 0
    %1956 = vmatpush1.bf16.msra.mxu0 %v1824
    %1957 = vmatprep.subr.bf16.mxu0 0
    %1958 = vmatpush1.bf16.msra.mxu0 %v1825
    %1959 = vmatprep.subr.bf16.mxu0 0
    %1960 = vmatpush1.bf16.msra.mxu0 %v1826
    %1961 = vmatprep.subr.bf16.mxu0 0
    %1962 = vmatpush1.bf16.msra.mxu0 %v1827
    %1963 = vmatprep.subr.bf16.mxu0 0
    %1964 = vmatpush1.bf16.msra.mxu0 %v1828
    %1965 = vmatprep.subr.bf16.mxu0 0
    %1966 = vmatpush1.bf16.msra.mxu0 %v1829
    %1967 = vmatprep.subr.bf16.mxu0 0
    %1968 = vmatpush1.bf16.msra.mxu0 0
    %1969 = vmatprep.subr.bf16.mxu0 0
    %1970 = vmatpush1.bf16.msra.mxu0 0
    %1971 = vmatprep.subr.bf16.mxu0 0
    %1972 = vmatpush1.bf16.msra.mxu0 0
    %1973 = vmatprep.subr.bf16.mxu0 0
    %1974 = vmatpush1.bf16.msra.mxu0 0
    %1975 = vmatprep.subr.bf16.mxu0 0
    %1976 = vmatpush1.bf16.msra.mxu0 0
    %1977 = vmatprep.subr.bf16.mxu0 0
    %1978 = vmatpush1.bf16.msra.mxu0 0
    %1979 = vmatprep.subr.bf16.mxu0 0
    %1980 = vmatpush1.bf16.msra.mxu0 0
    %1981 = vmatprep.subr.bf16.mxu0 0
    %1982 = vmatpush1.bf16.msra.mxu0 0
    %1983 = vmatprep.mubr.bf16.mxu0 0
    %1984 = vmatmul.mubr.bf16.gmra.mrb[0].mxu0 %v1633
    %v1985 = vpop.f32.mrb[0].mxu0
    %v1986 = vadd.f32 %v1889, %v1985
    %v1987 = vpop.f32.mrb[0].mxu0
    %v1988 = vpop.f32.mrb[0].mxu0
    %v1989 = vadd.f32 %v1892, %v1988
    %v1990 = vpop.f32.mrb[0].mxu0
    %1991 = vmatprep.mubr.bf16.mxu0 0
    %1992 = vmatmul.mubr.bf16.gmra.mrb[0].mxu0 %v1636
    %v1993 = vpop.f32.mrb[0].mxu0
    %v1994 = vadd.f32 %v1897, %v1993
    %v1995 = vpop.f32.mrb[0].mxu0
    %v1996 = vpop.f32.mrb[0].mxu0
    %v1997 = vadd.f32 %v1900, %v1996
    %v1998 = vpop.f32.mrb[0].mxu0
    %1999 = vmatprep.mubr.bf16.mxu0 0
    %2000 = vmatmul.mubr.bf16.gmra.mrb[0].mxu0 %v1639
    %v2001 = vpop.f32.mrb[0].mxu0
    %v2002 = vadd.f32 %v1905, %v2001
    %v2003 = vpop.f32.mrb[0].mxu0
    %v2004 = vpop.f32.mrb[0].mxu0
    %v2005 = vadd.f32 %v1908, %v2004
    %v2006 = vpop.f32.mrb[0].mxu0
    %2007 = vmatprep.mubr.bf16.mxu0 0
    %2008 = vmatmul.mubr.bf16.gmra.mrb[0].mxu0 %v1642
    %v2009 = vpop.f32.mrb[0].mxu0
    %v2010 = vadd.f32 %v1913, %v2009
    %v2011 = vpop.f32.mrb[0].mxu0
    %v2012 = vpop.f32.mrb[0].mxu0
    %v2013 = vadd.f32 %v1916, %v2012
    %v2014 = vpop.f32.mrb[0].mxu0
    %2015 = vmatprep.mubr.bf16.mxu0 0
    %2016 = vmatmul.mubr.bf16.gmra.mrb[0].mxu0 %v1645
    %v2017 = vpop.f32.mrb[0].mxu0
    %v2018 = vadd.f32 %v1921, %v2017
    %v2019 = vpop.f32.mrb[0].mxu0
    %v2020 = vpop.f32.mrb[0].mxu0
    %v2021 = vadd.f32 %v1924, %v2020
    %v2022 = vpop.f32.mrb[0].mxu0
    %2023 = vmatprep.mubr.bf16.mxu0 0
    %2024 = vmatmul.mubr.bf16.gmra.mrb[0].mxu0 %v1648
    %v2025 = vpop.f32.mrb[0].mxu0
    %v2026 = vadd.f32 %v1929, %v2025
    %v2027 = vpop.f32.mrb[0].mxu0
    %v2028 = vpop.f32.mrb[0].mxu0
    %v2029 = vadd.f32 %v1932, %v2028
    %v2030 = vpop.f32.mrb[0].mxu0
    %2031 = vmatprep.mubr.bf16.mxu0 0
    %2032 = vmatmul.mubr.bf16.gmra.mrb[0].mxu0 %v1651
    %v2033 = vpop.f32.mrb[0].mxu0
    %v2034 = vadd.f32 %v1937, %v2033
    %v2035 = vpop.f32.mrb[0].mxu0
    %v2036 = vpop.f32.mrb[0].mxu0
    %v2037 = vadd.f32 %v1940, %v2036
    %v2038 = vpop.f32.mrb[0].mxu0
    %2039 = vmatprep.mubr.bf16.mxu0 0
    %2040 = vmatmul.mubr.bf16.gmra.mrb[0].mxu0 %v1654
    %v2041 = vpop.f32.mrb[0].mxu0
    %v2042 = vadd.f32 %v1945, %v2041
    %v2043 = vpop.f32.mrb[0].mxu0
    %v2044 = vpop.f32.mrb[0].mxu0
    %v2045 = vadd.f32 %v1948, %v2044
    %v2046 = vpop.f32.mrb[0].mxu0
    %2047 = vdwg.mxu0
    %v2048 = vtanh.pop %v1986
    %v2049 = vtanh.pop %v1989
    %v2050 = vtanh.pop %v1994
    %v2051 = vtanh.pop %v1997
    %v2052 = vtanh.pop %v2002
    %v2053 = vtanh.pop %v2005
    %v2054 = vtanh.pop %v2010
    %v2055 = vtanh.pop %v2013
    %v2056 = vtanh.pop %v2018
    %v2057 = vtanh.pop %v2021
    %v2058 = vtanh.pop %v2026
    %v2059 = vtanh.pop %v2029
    %v2060 = vtanh.pop %v2034
    %v2061 = vtanh.pop %v2037
    %v2062 = vtanh.pop %v2042
    %v2063 = vtanh.pop %v2045
    %2064 = vst [vmem:[#allocation7] sm:$0xff] %v2048
    %2065 = vst [vmem:[#allocation7 + $0x8] sm:$0xff] %v2049
    %2066 = vst [vmem:[#allocation7 + $0x10] sm:$0xff] %v2050
    %2067 = vst [vmem:[#allocation7 + $0x18] sm:$0xff] %v2051
    %2068 = vst [vmem:[#allocation7 + $0x20] sm:$0xff] %v2052
    %2069 = vst [vmem:[#allocation7 + $0x28] sm:$0xff] %v2053
    %2070 = vst [vmem:[#allocation7 + $0x30] sm:$0xff] %v2054
    %2071 = vst [vmem:[#allocation7 + $0x38] sm:$0xff] %v2055
    %2072 = vst [vmem:[#allocation7 + $0x40] sm:$0xff] %v2056
    %2073 = vst [vmem:[#allocation7 + $0x48] sm:$0xff] %v2057
    %2074 = vst [vmem:[#allocation7 + $0x50] sm:$0xff] %v2058
    %2075 = vst [vmem:[#allocation7 + $0x58] sm:$0xff] %v2059
    %2076 = vst [vmem:[#allocation7 + $0x60] sm:$0xff] %v2060
    %2077 = vst [vmem:[#allocation7 + $0x68] sm:$0xff] %v2061
    %2078 = vst [vmem:[#allocation7 + $0x70] sm:$0xff] %v2062
    %2079 = vst [vmem:[#allocation7 + $0x78] sm:$0xff] %v2063
    // Predicated region
    $region38: #{tpu_custom_call.1} parent=1 // pred_check
      _
    $region39: #{tpu_custom_call.1} parent=1 // pred_check_branch
      %2081 = sbr.rel (0) target = $region41
    $region40: #{tpu_custom_call.1} parent=1 // pred_region
      %s2083 = ssub.s32 2048, 2048
      %2084 = vsyncadd [#allocation4], %s2083
      %s2085 = sshll.u32 [#allocation7], 4
      %s2086 = int_to_ptr.vmem [resolvable:$true] %s2085
      %2091 = dma.vmem_to_hbm [thread:$0]  %s2086, 2048, %s7, [#allocation4], 128, 128, 8
    $region41: #{tpu_custom_call.1} parent=1 // pred_fallthru
      _
    // Predicated region
    $region42: #{tpu_custom_call.1} parent=1 // pred_check
      _
    $region43: #{tpu_custom_call.1} parent=1 // pred_check_branch
      %2093 = sbr.rel (0) target = $region45
    $region44: #{tpu_custom_call.1} parent=1 // pred_region
      %2094 = dma.done [#allocation4], 2048
    $region45: #{tpu_custom_call.1} parent=1 // pred_fallthru
      _
    %2095 = vsyncpa [#allocation3], 1
    %2096 = vsyncpa [#allocation6], 1
    %2097 = vsyncpa [#allocation4], 1

</llo_original>
